<compile_context>
chip_gen: v5e
topology: v5e:2x2
jax: 0.10.0
libtpu: 0.0.40
codegen_flags: <defaults>
</compile_context>

<pallas_src>
import functools

import jax
import jax.numpy as jnp
from jax import lax
from jax.experimental import pallas as pl
from jax.experimental.pallas import tpu as pltpu


def _full_spec(shape):
    n = len(shape)
    return pl.BlockSpec(shape, lambda *_, _n=n: (0,) * _n)


def _detect_kernel(x_ref, masks_ref,
                   w1_ref, g1_ref, b1_ref,
                   w2_ref, g2_ref, b2_ref,
                   w3_ref, g3_ref, b3_ref,
                   w4_ref, g4_ref, b4_ref,
                   w5_ref, g5_ref, b5_ref,
                   out_ref,
                   patches_ref,
                   *, H, W, R, C1, C2, eps=1e-5, slope=0.1):
    """All five conv+BN+LeakyReLU layers fused; channel-major, lane-dense.

    x_ref:       (Cin0, R) f32   channel-major flattened input, R = N*H*W (lanes)
    masks_ref:   (9, R)    f32   per-tap zero-padding validity masks
    w1/w3/w5:    (Cout, Cin)     f32   1x1 conv weights
    w2/w4:       (C2, 9*C1)      f32   3x3 conv weights, tap-major im2col layout
    g*/b*:       (Cout, 1)       f32   BN gamma / beta
    out_ref:     (C1, R)   f32
    patches_ref: (9*C1, R) f32   VMEM im2col buffer (fully overwritten per layer)
    """
    inv_r = 1.0 / R

    def bn_lrelu(t, g_ref, b_ref):
        # t: (Cout, R). Two-pass batch stats (biased var, matching PyTorch BN).
        mean = jnp.sum(t, axis=1, keepdims=True) * inv_r
        c = t - mean
        var = jnp.sum(c * c, axis=1, keepdims=True) * inv_r
        scale = g_ref[...] * lax.rsqrt(var + eps)
        y = c * scale + b_ref[...]
        return jnp.where(y > 0, y, slope * y)

    def conv1x1(a, w_ref):
        # (Cout, Cin) @ (Cin, R) -> (Cout, R); R (multiple of 128) sits in lanes.
        return jnp.dot(w_ref[...], a, preferred_element_type=jnp.float32)

    def conv3x3(a, w_ref):
        # im2col: 9 rolled+masked copies of `a` (C1, R) into (9*C1, R) scratch,
        # then a single (C2, 9*C1) x (9*C1, R) matmul (K = 9*C1).
        for ky in range(3):
            for kx in range(3):
                dy, dx = ky - 1, kx - 1
                delta = dy * W + dx          # flat-index offset of this tap
                tap = ky * 3 + kx
                if delta == 0:
                    shifted = a
                else:
                    # shifted[:, p] = a[:, (p + delta) mod R]; out-of-image
                    # wraps are killed by the precomputed border mask.
                    shifted = pltpu.roll(a, shift=(-delta) % R, axis=1)
                patches_ref[tap * C1:(tap + 1) * C1, :] = (
                    shifted * masks_ref[tap:tap + 1, :])
        return jnp.dot(w_ref[...], patches_ref[...],
                       preferred_element_type=jnp.float32)

    a1 = bn_lrelu(conv1x1(x_ref[...], w1_ref), g1_ref, b1_ref)    # (C1, R)
    a2 = bn_lrelu(conv3x3(a1, w2_ref), g2_ref, b2_ref)            # (C2, R)
    a3 = bn_lrelu(conv1x1(a2, w3_ref), g3_ref, b3_ref)            # (C1, R)
    a4 = bn_lrelu(conv3x3(a3, w4_ref), g4_ref, b4_ref)            # (C2, R)
    out_ref[...] = bn_lrelu(conv1x1(a4, w5_ref), g5_ref, b5_ref)  # (C1, R)


def init_detection_block_params(key, in_channels, out_channels):
    """Parameters in PyTorch layouts (conv weight: (Cout, Cin, K, K))."""
    c1, c2 = out_channels, out_channels * 2
    cfg = [  # (Cin, Cout, K)
        (in_channels, c1, 1),
        (c1, c2, 3),
        (c2, c1, 1),
        (c1, c2, 3),
        (c2, c1, 1),
    ]
    layers = []
    for i, (cin, cout, k) in enumerate(cfg):
        wkey = jax.random.fold_in(key, i)
        gkey = jax.random.fold_in(key, 100 + i)
        bkey = jax.random.fold_in(key, 200 + i)
        fan_in = cin * k * k
        w = jax.random.normal(wkey, (cout, cin, k, k), jnp.float32)
        w = w / jnp.sqrt(jnp.float32(fan_in))
        gamma = 1.0 + 0.1 * jax.random.normal(gkey, (cout,), jnp.float32)
        beta = 0.1 * jax.random.normal(bkey, (cout,), jnp.float32)
        layers.append(dict(w=w, gamma=gamma, beta=beta))
    return dict(layers=layers, c1=c1, c2=c2)


def detection_block_forward(x_nchw, params):
    """Forward pass of detection_block. Input NCHW (PyTorch), output NCHW."""
    N, cin0, H, W = x_nchw.shape
    C1, C2 = params["c1"], params["c2"]
    R = N * H * W

    # Channel-major, lane-dense activations: (C, N*H*W); R is a multiple of 128.
    x2d = jnp.transpose(x_nchw, (1, 0, 2, 3)).reshape(cin0, R)

    # Border-validity masks for the 9 taps of a 3x3, pad=1 conv (zero padding).
    p = jnp.arange(R, dtype=jnp.int32)
    ww = p % W
    hh = (p // W) % H
    masks = []
    for ky in range(3):
        for kx in range(3):
            dy, dx = ky - 1, kx - 1
            ok = ((hh + dy >= 0) & (hh + dy < H) &
                  (ww + dx >= 0) & (ww + dx < W))
            masks.append(ok)
    masks = jnp.stack(masks).astype(jnp.float32)  # (9, R)

    flat_args = [x2d, masks]
    for lyr in params["layers"]:
        w = lyr["w"]                                   # (Cout, Cin, K, K)
        cout = w.shape[0]
        if w.shape[2] == 1:
            wk = w[:, :, 0, 0]                         # (Cout, Cin)
        else:                                          # tap-major im2col layout
            wk = jnp.transpose(w, (0, 2, 3, 1)).reshape(cout, -1)  # (Cout, 9*Cin)
        flat_args += [wk,
                      lyr["gamma"].reshape(cout, 1),
                      lyr["beta"].reshape(cout, 1)]

    kernel = functools.partial(_detect_kernel, H=H, W=W, R=R, C1=C1, C2=C2)

    y2d = pl.pallas_call(
        kernel,
        out_shape=jax.ShapeDtypeStruct((C1, R), jnp.float32),
        in_specs=[_full_spec(a.shape) for a in flat_args],
        out_specs=_full_spec((C1, R)),
        scratch_shapes=[pltpu.VMEM((9 * C1, R), jnp.float32)],   # im2col buffer
    )(*flat_args)

    return jnp.transpose(y2d.reshape(C1, N, H, W), (1, 0, 2, 3))


def detection_block_reference(x, params, eps=1e-5, slope=0.1):
    """Pure-JAX reference mirroring the PyTorch module (train-mode BN)."""
    y = x
    for lyr in params["layers"]:
        w = lyr["w"]
        k = w.shape[2]
        pad = (k - 1) // 2
        y = lax.conv_general_dilated(
            y, w, window_strides=(1, 1), padding=[(pad, pad), (pad, pad)],
            dimension_numbers=("NCHW", "OIHW", "NCHW"),
            precision=lax.Precision.HIGHEST)
        mean = jnp.mean(y, axis=(0, 2, 3), keepdims=True)
        var = jnp.mean((y - mean) ** 2, axis=(0, 2, 3), keepdims=True)
        y = (y - mean) * lax.rsqrt(var + eps)
        y = y * lyr["gamma"].reshape(1, -1, 1, 1) + lyr["beta"].reshape(1, -1, 1, 1)
        y = jnp.where(y > 0, y, slope * y)
    return y


if __name__ == "__main__":
    key = jax.random.PRNGKey(0)
    # Small shapes consistent with the module: N=2, Cin=4, H=W=16, out_channels=8.
    N, Cin, H, W = 2, 4, 16, 16
    out_channels = 8

    xkey, pkey = jax.random.split(key)
    x = jax.random.normal(xkey, (N, Cin, H, W), jnp.float32)
    params = init_detection_block_params(pkey, Cin, out_channels)

    fwd = jax.jit(lambda inp: detection_block_forward(inp, params))
    y = fwd(x)
    jax.block_until_ready(y)

    assert y.shape == (N, out_channels, H, W), y.shape
    assert bool(jnp.all(jnp.isfinite(y)))

    y_ref = detection_block_reference(x, params)
    max_err = float(jnp.max(jnp.abs(y - y_ref)))
    assert max_err < 3e-2, f"max abs err vs reference: {max_err}"

    print("KERNEL_OK")
</pallas_src>

<mosaic_0001>
module attributes {stable_mosaic.version = 11 : i64} {
  func.func @_detect_kernel(%arg0: memref<4x512xf32, #tpu.memory_space<vmem>>, %arg1: memref<9x512xf32, #tpu.memory_space<vmem>>, %arg2: memref<8x4xf32, #tpu.memory_space<vmem>>, %arg3: memref<8x1xf32, #tpu.memory_space<vmem>>, %arg4: memref<8x1xf32, #tpu.memory_space<vmem>>, %arg5: memref<16x72xf32, #tpu.memory_space<vmem>>, %arg6: memref<16x1xf32, #tpu.memory_space<vmem>>, %arg7: memref<16x1xf32, #tpu.memory_space<vmem>>, %arg8: memref<8x16xf32, #tpu.memory_space<vmem>>, %arg9: memref<8x1xf32, #tpu.memory_space<vmem>>, %arg10: memref<8x1xf32, #tpu.memory_space<vmem>>, %arg11: memref<16x72xf32, #tpu.memory_space<vmem>>, %arg12: memref<16x1xf32, #tpu.memory_space<vmem>>, %arg13: memref<16x1xf32, #tpu.memory_space<vmem>>, %arg14: memref<8x16xf32, #tpu.memory_space<vmem>>, %arg15: memref<8x1xf32, #tpu.memory_space<vmem>>, %arg16: memref<8x1xf32, #tpu.memory_space<vmem>>, %arg17: memref<8x512xf32, #tpu.memory_space<vmem>>, %arg18: memref<72x512xf32, #tpu.memory_space<vmem>>) attributes {dimension_semantics = [], scalar_prefetch = 0 : i64, scratch_operands = 1 : i64, tpu.core_type = #tpu.core_type<tc>} {
    %c0 = arith.constant 0 : index
    %c0_0 = arith.constant 0 : index
    %0 = vector.load %arg0[%c0, %c0_0] : memref<4x512xf32, #tpu.memory_space<vmem>>, vector<4x512xf32>
    %c0_1 = arith.constant 0 : index
    %c0_2 = arith.constant 0 : index
    %1 = vector.load %arg2[%c0_1, %c0_2] : memref<8x4xf32, #tpu.memory_space<vmem>>, vector<8x4xf32>
    %cst = arith.constant dense<0.000000e+00> : vector<8x512xf32>
    %2 = tpu.matmul %1, %0, %cst {dimension_numbers = #tpu.dot_dimension_numbers<[1], [0], [0], [1], [0, 0, 1, 1], [], []>} : vector<8x4xf32>, vector<4x512xf32>, vector<8x512xf32> -> vector<8x512xf32>
    %cst_3 = arith.constant dense<0.000000e+00> : vector<8xf32>
    %3 = vector.multi_reduction <add>, %2, %cst_3 [1] : vector<8x512xf32> to vector<8xf32>
    %4 = vector.shape_cast %3 : vector<8xf32> to vector<8x1xf32>
    %cst_4 = arith.constant 0.001953125 : f32
    %5 = vector.broadcast %cst_4 : f32 to vector<8x1xf32>
    %6 = arith.mulf %4, %5 : vector<8x1xf32>
    %7 = vector.broadcast %6 : vector<8x1xf32> to vector<8x512xf32>
    %8 = arith.subf %2, %7 : vector<8x512xf32>
    %9 = arith.mulf %8, %8 : vector<8x512xf32>
    %cst_5 = arith.constant dense<0.000000e+00> : vector<8xf32>
    %10 = vector.multi_reduction <add>, %9, %cst_5 [1] : vector<8x512xf32> to vector<8xf32>
    %11 = vector.shape_cast %10 : vector<8xf32> to vector<8x1xf32>
    %cst_6 = arith.constant 0.001953125 : f32
    %12 = vector.broadcast %cst_6 : f32 to vector<8x1xf32>
    %13 = arith.mulf %11, %12 : vector<8x1xf32>
    %c0_7 = arith.constant 0 : index
    %c0_8 = arith.constant 0 : index
    %14 = vector.load %arg3[%c0_7, %c0_8] : memref<8x1xf32, #tpu.memory_space<vmem>>, vector<8x1xf32>
    %cst_9 = arith.constant 9.99999974E-6 : f32
    %15 = vector.broadcast %cst_9 : f32 to vector<8x1xf32>
    %16 = arith.addf %13, %15 : vector<8x1xf32>
    %17 = math.rsqrt %16 : vector<8x1xf32>
    %18 = arith.mulf %14, %17 : vector<8x1xf32>
    %19 = vector.broadcast %18 : vector<8x1xf32> to vector<8x512xf32>
    %20 = arith.mulf %8, %19 : vector<8x512xf32>
    %c0_10 = arith.constant 0 : index
    %c0_11 = arith.constant 0 : index
    %21 = vector.load %arg4[%c0_10, %c0_11] : memref<8x1xf32, #tpu.memory_space<vmem>>, vector<8x1xf32>
    %22 = vector.broadcast %21 : vector<8x1xf32> to vector<8x512xf32>
    %23 = arith.addf %20, %22 : vector<8x512xf32>
    %cst_12 = arith.constant 0.000000e+00 : f32
    %24 = vector.broadcast %cst_12 : f32 to vector<8x512xf32>
    %25 = arith.cmpf ogt, %23, %24 : vector<8x512xf32>
    %cst_13 = arith.constant 1.000000e-01 : f32
    %26 = vector.broadcast %cst_13 : f32 to vector<8x512xf32>
    %27 = arith.mulf %26, %23 : vector<8x512xf32>
    %28 = arith.select %25, %23, %27 : vector<8x512xi1>, vector<8x512xf32>
    %c17_i32 = arith.constant 17 : i32
    %29 = tpu.dynamic_rotate %28 by %c17_i32 dim 1 : vector<8x512xf32>, i32 -> vector<8x512xf32>
    %c0_14 = arith.constant 0 : index
    %c0_15 = arith.constant 0 : index
    %30 = vector.load %arg1[%c0_14, %c0_15] : memref<9x512xf32, #tpu.memory_space<vmem>>, vector<1x512xf32>
    %31 = vector.broadcast %30 : vector<1x512xf32> to vector<8x512xf32>
    %32 = arith.mulf %29, %31 : vector<8x512xf32>
    %c0_16 = arith.constant 0 : index
    %c0_17 = arith.constant 0 : index
    %33 = vector.load %arg18[%c0_16, %c0_17] : memref<72x512xf32, #tpu.memory_space<vmem>>, vector<8x512xf32>
    tpu.vector_store %arg18[%c0_16, %c0_17], %32 {strides = array<i32>} : memref<72x512xf32, #tpu.memory_space<vmem>>, vector<8x512xf32>,
    %c16_i32 = arith.constant 16 : i32
    %34 = tpu.dynamic_rotate %28 by %c16_i32 dim 1 : vector<8x512xf32>, i32 -> vector<8x512xf32>
    %c1 = arith.constant 1 : index
    %c0_18 = arith.constant 0 : index
    %35 = vector.load %arg1[%c1, %c0_18] : memref<9x512xf32, #tpu.memory_space<vmem>>, vector<1x512xf32>
    %36 = vector.broadcast %35 : vector<1x512xf32> to vector<8x512xf32>
    %37 = arith.mulf %34, %36 : vector<8x512xf32>
    %c8 = arith.constant 8 : index
    %c0_19 = arith.constant 0 : index
    %38 = vector.load %arg18[%c8, %c0_19] : memref<72x512xf32, #tpu.memory_space<vmem>>, vector<8x512xf32>
    tpu.vector_store %arg18[%c8, %c0_19], %37 {strides = array<i32>} : memref<72x512xf32, #tpu.memory_space<vmem>>, vector<8x512xf32>,
    %c15_i32 = arith.constant 15 : i32
    %39 = tpu.dynamic_rotate %28 by %c15_i32 dim 1 : vector<8x512xf32>, i32 -> vector<8x512xf32>
    %c2 = arith.constant 2 : index
    %c0_20 = arith.constant 0 : index
    %40 = vector.load %arg1[%c2, %c0_20] : memref<9x512xf32, #tpu.memory_space<vmem>>, vector<1x512xf32>
    %41 = vector.broadcast %40 : vector<1x512xf32> to vector<8x512xf32>
    %42 = arith.mulf %39, %41 : vector<8x512xf32>
    %c16 = arith.constant 16 : index
    %c0_21 = arith.constant 0 : index
    %43 = vector.load %arg18[%c16, %c0_21] : memref<72x512xf32, #tpu.memory_space<vmem>>, vector<8x512xf32>
    tpu.vector_store %arg18[%c16, %c0_21], %42 {strides = array<i32>} : memref<72x512xf32, #tpu.memory_space<vmem>>, vector<8x512xf32>,
    %c1_i32 = arith.constant 1 : i32
    %44 = tpu.dynamic_rotate %28 by %c1_i32 dim 1 : vector<8x512xf32>, i32 -> vector<8x512xf32>
    %c3 = arith.constant 3 : index
    %c0_22 = arith.constant 0 : index
    %45 = vector.load %arg1[%c3, %c0_22] : memref<9x512xf32, #tpu.memory_space<vmem>>, vector<1x512xf32>
    %46 = vector.broadcast %45 : vector<1x512xf32> to vector<8x512xf32>
    %47 = arith.mulf %44, %46 : vector<8x512xf32>
    %c24 = arith.constant 24 : index
    %c0_23 = arith.constant 0 : index
    %48 = vector.load %arg18[%c24, %c0_23] : memref<72x512xf32, #tpu.memory_space<vmem>>, vector<8x512xf32>
    tpu.vector_store %arg18[%c24, %c0_23], %47 {strides = array<i32>} : memref<72x512xf32, #tpu.memory_space<vmem>>, vector<8x512xf32>,
    %c4 = arith.constant 4 : index
    %c0_24 = arith.constant 0 : index
    %49 = vector.load %arg1[%c4, %c0_24] : memref<9x512xf32, #tpu.memory_space<vmem>>, vector<1x512xf32>
    %50 = vector.broadcast %49 : vector<1x512xf32> to vector<8x512xf32>
    %51 = arith.mulf %28, %50 : vector<8x512xf32>
    %c32 = arith.constant 32 : index
    %c0_25 = arith.constant 0 : index
    %52 = vector.load %arg18[%c32, %c0_25] : memref<72x512xf32, #tpu.memory_space<vmem>>, vector<8x512xf32>
    tpu.vector_store %arg18[%c32, %c0_25], %51 {strides = array<i32>} : memref<72x512xf32, #tpu.memory_space<vmem>>, vector<8x512xf32>,
    %c511_i32 = arith.constant 511 : i32
    %53 = tpu.dynamic_rotate %28 by %c511_i32 dim 1 : vector<8x512xf32>, i32 -> vector<8x512xf32>
    %c5 = arith.constant 5 : index
    %c0_26 = arith.constant 0 : index
    %54 = vector.load %arg1[%c5, %c0_26] : memref<9x512xf32, #tpu.memory_space<vmem>>, vector<1x512xf32>
    %55 = vector.broadcast %54 : vector<1x512xf32> to vector<8x512xf32>
    %56 = arith.mulf %53, %55 : vector<8x512xf32>
    %c40 = arith.constant 40 : index
    %c0_27 = arith.constant 0 : index
    %57 = vector.load %arg18[%c40, %c0_27] : memref<72x512xf32, #tpu.memory_space<vmem>>, vector<8x512xf32>
    tpu.vector_store %arg18[%c40, %c0_27], %56 {strides = array<i32>} : memref<72x512xf32, #tpu.memory_space<vmem>>, vector<8x512xf32>,
    %c497_i32 = arith.constant 497 : i32
    %58 = tpu.dynamic_rotate %28 by %c497_i32 dim 1 : vector<8x512xf32>, i32 -> vector<8x512xf32>
    %c6 = arith.constant 6 : index
    %c0_28 = arith.constant 0 : index
    %59 = vector.load %arg1[%c6, %c0_28] : memref<9x512xf32, #tpu.memory_space<vmem>>, vector<1x512xf32>
    %60 = vector.broadcast %59 : vector<1x512xf32> to vector<8x512xf32>
    %61 = arith.mulf %58, %60 : vector<8x512xf32>
    %c48 = arith.constant 48 : index
    %c0_29 = arith.constant 0 : index
    %62 = vector.load %arg18[%c48, %c0_29] : memref<72x512xf32, #tpu.memory_space<vmem>>, vector<8x512xf32>
    tpu.vector_store %arg18[%c48, %c0_29], %61 {strides = array<i32>} : memref<72x512xf32, #tpu.memory_space<vmem>>, vector<8x512xf32>,
    %c496_i32 = arith.constant 496 : i32
    %63 = tpu.dynamic_rotate %28 by %c496_i32 dim 1 : vector<8x512xf32>, i32 -> vector<8x512xf32>
    %c7 = arith.constant 7 : index
    %c0_30 = arith.constant 0 : index
    %64 = vector.load %arg1[%c7, %c0_30] : memref<9x512xf32, #tpu.memory_space<vmem>>, vector<1x512xf32>
    %65 = vector.broadcast %64 : vector<1x512xf32> to vector<8x512xf32>
    %66 = arith.mulf %63, %65 : vector<8x512xf32>
    %c56 = arith.constant 56 : index
    %c0_31 = arith.constant 0 : index
    %67 = vector.load %arg18[%c56, %c0_31] : memref<72x512xf32, #tpu.memory_space<vmem>>, vector<8x512xf32>
    tpu.vector_store %arg18[%c56, %c0_31], %66 {strides = array<i32>} : memref<72x512xf32, #tpu.memory_space<vmem>>, vector<8x512xf32>,
    %c495_i32 = arith.constant 495 : i32
    %68 = tpu.dynamic_rotate %28 by %c495_i32 dim 1 : vector<8x512xf32>, i32 -> vector<8x512xf32>
    %c8_32 = arith.constant 8 : index
    %c0_33 = arith.constant 0 : index
    %69 = vector.load %arg1[%c8_32, %c0_33] : memref<9x512xf32, #tpu.memory_space<vmem>>, vector<1x512xf32>
    %70 = vector.broadcast %69 : vector<1x512xf32> to vector<8x512xf32>
    %71 = arith.mulf %68, %70 : vector<8x512xf32>
    %c64 = arith.constant 64 : index
    %c0_34 = arith.constant 0 : index
    %72 = vector.load %arg18[%c64, %c0_34] : memref<72x512xf32, #tpu.memory_space<vmem>>, vector<8x512xf32>
    tpu.vector_store %arg18[%c64, %c0_34], %71 {strides = array<i32>} : memref<72x512xf32, #tpu.memory_space<vmem>>, vector<8x512xf32>,
    %c0_35 = arith.constant 0 : index
    %c0_36 = arith.constant 0 : index
    %73 = vector.load %arg5[%c0_35, %c0_36] : memref<16x72xf32, #tpu.memory_space<vmem>>, vector<16x72xf32>
    %c0_37 = arith.constant 0 : index
    %c0_38 = arith.constant 0 : index
    %74 = vector.load %arg18[%c0_37, %c0_38] : memref<72x512xf32, #tpu.memory_space<vmem>>, vector<72x512xf32>
    %cst_39 = arith.constant dense<0.000000e+00> : vector<16x512xf32>
    %75 = tpu.matmul %73, %74, %cst_39 {dimension_numbers = #tpu.dot_dimension_numbers<[1], [0], [0], [1], [0, 0, 1, 1], [], []>} : vector<16x72xf32>, vector<72x512xf32>, vector<16x512xf32> -> vector<16x512xf32>
    %cst_40 = arith.constant dense<0.000000e+00> : vector<16xf32>
    %76 = vector.multi_reduction <add>, %75, %cst_40 [1] : vector<16x512xf32> to vector<16xf32>
    %77 = vector.shape_cast %76 : vector<16xf32> to vector<16x1xf32>
    %cst_41 = arith.constant 0.001953125 : f32
    %78 = vector.broadcast %cst_41 : f32 to vector<16x1xf32>
    %79 = arith.mulf %77, %78 : vector<16x1xf32>
    %80 = vector.broadcast %79 : vector<16x1xf32> to vector<16x512xf32>
    %81 = arith.subf %75, %80 : vector<16x512xf32>
    %82 = arith.mulf %81, %81 : vector<16x512xf32>
    %cst_42 = arith.constant dense<0.000000e+00> : vector<16xf32>
    %83 = vector.multi_reduction <add>, %82, %cst_42 [1] : vector<16x512xf32> to vector<16xf32>
    %84 = vector.shape_cast %83 : vector<16xf32> to vector<16x1xf32>
    %cst_43 = arith.constant 0.001953125 : f32
    %85 = vector.broadcast %cst_43 : f32 to vector<16x1xf32>
    %86 = arith.mulf %84, %85 : vector<16x1xf32>
    %c0_44 = arith.constant 0 : index
    %c0_45 = arith.constant 0 : index
    %87 = vector.load %arg6[%c0_44, %c0_45] : memref<16x1xf32, #tpu.memory_space<vmem>>, vector<16x1xf32>
    %cst_46 = arith.constant 9.99999974E-6 : f32
    %88 = vector.broadcast %cst_46 : f32 to vector<16x1xf32>
    %89 = arith.addf %86, %88 : vector<16x1xf32>
    %90 = math.rsqrt %89 : vector<16x1xf32>
    %91 = arith.mulf %87, %90 : vector<16x1xf32>
    %92 = vector.broadcast %91 : vector<16x1xf32> to vector<16x512xf32>
    %93 = arith.mulf %81, %92 : vector<16x512xf32>
    %c0_47 = arith.constant 0 : index
    %c0_48 = arith.constant 0 : index
    %94 = vector.load %arg7[%c0_47, %c0_48] : memref<16x1xf32, #tpu.memory_space<vmem>>, vector<16x1xf32>
    %95 = vector.broadcast %94 : vector<16x1xf32> to vector<16x512xf32>
    %96 = arith.addf %93, %95 : vector<16x512xf32>
    %cst_49 = arith.constant 0.000000e+00 : f32
    %97 = vector.broadcast %cst_49 : f32 to vector<16x512xf32>
    %98 = arith.cmpf ogt, %96, %97 : vector<16x512xf32>
    %cst_50 = arith.constant 1.000000e-01 : f32
    %99 = vector.broadcast %cst_50 : f32 to vector<16x512xf32>
    %100 = arith.mulf %99, %96 : vector<16x512xf32>
    %101 = arith.select %98, %96, %100 : vector<16x512xi1>, vector<16x512xf32>
    %c0_51 = arith.constant 0 : index
    %c0_52 = arith.constant 0 : index
    %102 = vector.load %arg8[%c0_51, %c0_52] : memref<8x16xf32, #tpu.memory_space<vmem>>, vector<8x16xf32>
    %cst_53 = arith.constant dense<0.000000e+00> : vector<8x512xf32>
    %103 = tpu.matmul %102, %101, %cst_53 {dimension_numbers = #tpu.dot_dimension_numbers<[1], [0], [0], [1], [0, 0, 1, 1], [], []>} : vector<8x16xf32>, vector<16x512xf32>, vector<8x512xf32> -> vector<8x512xf32>
    %cst_54 = arith.constant dense<0.000000e+00> : vector<8xf32>
    %104 = vector.multi_reduction <add>, %103, %cst_54 [1] : vector<8x512xf32> to vector<8xf32>
    %105 = vector.shape_cast %104 : vector<8xf32> to vector<8x1xf32>
    %cst_55 = arith.constant 0.001953125 : f32
    %106 = vector.broadcast %cst_55 : f32 to vector<8x1xf32>
    %107 = arith.mulf %105, %106 : vector<8x1xf32>
    %108 = vector.broadcast %107 : vector<8x1xf32> to vector<8x512xf32>
    %109 = arith.subf %103, %108 : vector<8x512xf32>
    %110 = arith.mulf %109, %109 : vector<8x512xf32>
    %cst_56 = arith.constant dense<0.000000e+00> : vector<8xf32>
    %111 = vector.multi_reduction <add>, %110, %cst_56 [1] : vector<8x512xf32> to vector<8xf32>
    %112 = vector.shape_cast %111 : vector<8xf32> to vector<8x1xf32>
    %cst_57 = arith.constant 0.001953125 : f32
    %113 = vector.broadcast %cst_57 : f32 to vector<8x1xf32>
    %114 = arith.mulf %112, %113 : vector<8x1xf32>
    %c0_58 = arith.constant 0 : index
    %c0_59 = arith.constant 0 : index
    %115 = vector.load %arg9[%c0_58, %c0_59] : memref<8x1xf32, #tpu.memory_space<vmem>>, vector<8x1xf32>
    %cst_60 = arith.constant 9.99999974E-6 : f32
    %116 = vector.broadcast %cst_60 : f32 to vector<8x1xf32>
    %117 = arith.addf %114, %116 : vector<8x1xf32>
    %118 = math.rsqrt %117 : vector<8x1xf32>
    %119 = arith.mulf %115, %118 : vector<8x1xf32>
    %120 = vector.broadcast %119 : vector<8x1xf32> to vector<8x512xf32>
    %121 = arith.mulf %109, %120 : vector<8x512xf32>
    %c0_61 = arith.constant 0 : index
    %c0_62 = arith.constant 0 : index
    %122 = vector.load %arg10[%c0_61, %c0_62] : memref<8x1xf32, #tpu.memory_space<vmem>>, vector<8x1xf32>
    %123 = vector.broadcast %122 : vector<8x1xf32> to vector<8x512xf32>
    %124 = arith.addf %121, %123 : vector<8x512xf32>
    %cst_63 = arith.constant 0.000000e+00 : f32
    %125 = vector.broadcast %cst_63 : f32 to vector<8x512xf32>
    %126 = arith.cmpf ogt, %124, %125 : vector<8x512xf32>
    %cst_64 = arith.constant 1.000000e-01 : f32
    %127 = vector.broadcast %cst_64 : f32 to vector<8x512xf32>
    %128 = arith.mulf %127, %124 : vector<8x512xf32>
    %129 = arith.select %126, %124, %128 : vector<8x512xi1>, vector<8x512xf32>
    %c17_i32_65 = arith.constant 17 : i32
    %130 = tpu.dynamic_rotate %129 by %c17_i32_65 dim 1 : vector<8x512xf32>, i32 -> vector<8x512xf32>
    %c0_66 = arith.constant 0 : index
    %c0_67 = arith.constant 0 : index
    %131 = vector.load %arg1[%c0_66, %c0_67] : memref<9x512xf32, #tpu.memory_space<vmem>>, vector<1x512xf32>
    %132 = vector.broadcast %131 : vector<1x512xf32> to vector<8x512xf32>
    %133 = arith.mulf %130, %132 : vector<8x512xf32>
    %c0_68 = arith.constant 0 : index
    %c0_69 = arith.constant 0 : index
    %134 = vector.load %arg18[%c0_68, %c0_69] : memref<72x512xf32, #tpu.memory_space<vmem>>, vector<8x512xf32>
    tpu.vector_store %arg18[%c0_68, %c0_69], %133 {strides = array<i32>} : memref<72x512xf32, #tpu.memory_space<vmem>>, vector<8x512xf32>,
    %c16_i32_70 = arith.constant 16 : i32
    %135 = tpu.dynamic_rotate %129 by %c16_i32_70 dim 1 : vector<8x512xf32>, i32 -> vector<8x512xf32>
    %c1_71 = arith.constant 1 : index
    %c0_72 = arith.constant 0 : index
    %136 = vector.load %arg1[%c1_71, %c0_72] : memref<9x512xf32, #tpu.memory_space<vmem>>, vector<1x512xf32>
    %137 = vector.broadcast %136 : vector<1x512xf32> to vector<8x512xf32>
    %138 = arith.mulf %135, %137 : vector<8x512xf32>
    %c8_73 = arith.constant 8 : index
    %c0_74 = arith.constant 0 : index
    %139 = vector.load %arg18[%c8_73, %c0_74] : memref<72x512xf32, #tpu.memory_space<vmem>>, vector<8x512xf32>
    tpu.vector_store %arg18[%c8_73, %c0_74], %138 {strides = array<i32>} : memref<72x512xf32, #tpu.memory_space<vmem>>, vector<8x512xf32>,
    %c15_i32_75 = arith.constant 15 : i32
    %140 = tpu.dynamic_rotate %129 by %c15_i32_75 dim 1 : vector<8x512xf32>, i32 -> vector<8x512xf32>
    %c2_76 = arith.constant 2 : index
    %c0_77 = arith.constant 0 : index
    %141 = vector.load %arg1[%c2_76, %c0_77] : memref<9x512xf32, #tpu.memory_space<vmem>>, vector<1x512xf32>
    %142 = vector.broadcast %141 : vector<1x512xf32> to vector<8x512xf32>
    %143 = arith.mulf %140, %142 : vector<8x512xf32>
    %c16_78 = arith.constant 16 : index
    %c0_79 = arith.constant 0 : index
    %144 = vector.load %arg18[%c16_78, %c0_79] : memref<72x512xf32, #tpu.memory_space<vmem>>, vector<8x512xf32>
    tpu.vector_store %arg18[%c16_78, %c0_79], %143 {strides = array<i32>} : memref<72x512xf32, #tpu.memory_space<vmem>>, vector<8x512xf32>,
    %c1_i32_80 = arith.constant 1 : i32
    %145 = tpu.dynamic_rotate %129 by %c1_i32_80 dim 1 : vector<8x512xf32>, i32 -> vector<8x512xf32>
    %c3_81 = arith.constant 3 : index
    %c0_82 = arith.constant 0 : index
    %146 = vector.load %arg1[%c3_81, %c0_82] : memref<9x512xf32, #tpu.memory_space<vmem>>, vector<1x512xf32>
    %147 = vector.broadcast %146 : vector<1x512xf32> to vector<8x512xf32>
    %148 = arith.mulf %145, %147 : vector<8x512xf32>
    %c24_83 = arith.constant 24 : index
    %c0_84 = arith.constant 0 : index
    %149 = vector.load %arg18[%c24_83, %c0_84] : memref<72x512xf32, #tpu.memory_space<vmem>>, vector<8x512xf32>
    tpu.vector_store %arg18[%c24_83, %c0_84], %148 {strides = array<i32>} : memref<72x512xf32, #tpu.memory_space<vmem>>, vector<8x512xf32>,
    %c4_85 = arith.constant 4 : index
    %c0_86 = arith.constant 0 : index
    %150 = vector.load %arg1[%c4_85, %c0_86] : memref<9x512xf32, #tpu.memory_space<vmem>>, vector<1x512xf32>
    %151 = vector.broadcast %150 : vector<1x512xf32> to vector<8x512xf32>
    %152 = arith.mulf %129, %151 : vector<8x512xf32>
    %c32_87 = arith.constant 32 : index
    %c0_88 = arith.constant 0 : index
    %153 = vector.load %arg18[%c32_87, %c0_88] : memref<72x512xf32, #tpu.memory_space<vmem>>, vector<8x512xf32>
    tpu.vector_store %arg18[%c32_87, %c0_88], %152 {strides = array<i32>} : memref<72x512xf32, #tpu.memory_space<vmem>>, vector<8x512xf32>,
    %c511_i32_89 = arith.constant 511 : i32
    %154 = tpu.dynamic_rotate %129 by %c511_i32_89 dim 1 : vector<8x512xf32>, i32 -> vector<8x512xf32>
    %c5_90 = arith.constant 5 : index
    %c0_91 = arith.constant 0 : index
    %155 = vector.load %arg1[%c5_90, %c0_91] : memref<9x512xf32, #tpu.memory_space<vmem>>, vector<1x512xf32>
    %156 = vector.broadcast %155 : vector<1x512xf32> to vector<8x512xf32>
    %157 = arith.mulf %154, %156 : vector<8x512xf32>
    %c40_92 = arith.constant 40 : index
    %c0_93 = arith.constant 0 : index
    %158 = vector.load %arg18[%c40_92, %c0_93] : memref<72x512xf32, #tpu.memory_space<vmem>>, vector<8x512xf32>
    tpu.vector_store %arg18[%c40_92, %c0_93], %157 {strides = array<i32>} : memref<72x512xf32, #tpu.memory_space<vmem>>, vector<8x512xf32>,
    %c497_i32_94 = arith.constant 497 : i32
    %159 = tpu.dynamic_rotate %129 by %c497_i32_94 dim 1 : vector<8x512xf32>, i32 -> vector<8x512xf32>
    %c6_95 = arith.constant 6 : index
    %c0_96 = arith.constant 0 : index
    %160 = vector.load %arg1[%c6_95, %c0_96] : memref<9x512xf32, #tpu.memory_space<vmem>>, vector<1x512xf32>
    %161 = vector.broadcast %160 : vector<1x512xf32> to vector<8x512xf32>
    %162 = arith.mulf %159, %161 : vector<8x512xf32>
    %c48_97 = arith.constant 48 : index
    %c0_98 = arith.constant 0 : index
    %163 = vector.load %arg18[%c48_97, %c0_98] : memref<72x512xf32, #tpu.memory_space<vmem>>, vector<8x512xf32>
    tpu.vector_store %arg18[%c48_97, %c0_98], %162 {strides = array<i32>} : memref<72x512xf32, #tpu.memory_space<vmem>>, vector<8x512xf32>,
    %c496_i32_99 = arith.constant 496 : i32
    %164 = tpu.dynamic_rotate %129 by %c496_i32_99 dim 1 : vector<8x512xf32>, i32 -> vector<8x512xf32>
    %c7_100 = arith.constant 7 : index
    %c0_101 = arith.constant 0 : index
    %165 = vector.load %arg1[%c7_100, %c0_101] : memref<9x512xf32, #tpu.memory_space<vmem>>, vector<1x512xf32>
    %166 = vector.broadcast %165 : vector<1x512xf32> to vector<8x512xf32>
    %167 = arith.mulf %164, %166 : vector<8x512xf32>
    %c56_102 = arith.constant 56 : index
    %c0_103 = arith.constant 0 : index
    %168 = vector.load %arg18[%c56_102, %c0_103] : memref<72x512xf32, #tpu.memory_space<vmem>>, vector<8x512xf32>
    tpu.vector_store %arg18[%c56_102, %c0_103], %167 {strides = array<i32>} : memref<72x512xf32, #tpu.memory_space<vmem>>, vector<8x512xf32>,
    %c495_i32_104 = arith.constant 495 : i32
    %169 = tpu.dynamic_rotate %129 by %c495_i32_104 dim 1 : vector<8x512xf32>, i32 -> vector<8x512xf32>
    %c8_105 = arith.constant 8 : index
    %c0_106 = arith.constant 0 : index
    %170 = vector.load %arg1[%c8_105, %c0_106] : memref<9x512xf32, #tpu.memory_space<vmem>>, vector<1x512xf32>
    %171 = vector.broadcast %170 : vector<1x512xf32> to vector<8x512xf32>
    %172 = arith.mulf %169, %171 : vector<8x512xf32>
    %c64_107 = arith.constant 64 : index
    %c0_108 = arith.constant 0 : index
    %173 = vector.load %arg18[%c64_107, %c0_108] : memref<72x512xf32, #tpu.memory_space<vmem>>, vector<8x512xf32>
    tpu.vector_store %arg18[%c64_107, %c0_108], %172 {strides = array<i32>} : memref<72x512xf32, #tpu.memory_space<vmem>>, vector<8x512xf32>,
    %c0_109 = arith.constant 0 : index
    %c0_110 = arith.constant 0 : index
    %174 = vector.load %arg11[%c0_109, %c0_110] : memref<16x72xf32, #tpu.memory_space<vmem>>, vector<16x72xf32>
    %c0_111 = arith.constant 0 : index
    %c0_112 = arith.constant 0 : index
    %175 = vector.load %arg18[%c0_111, %c0_112] : memref<72x512xf32, #tpu.memory_space<vmem>>, vector<72x512xf32>
    %cst_113 = arith.constant dense<0.000000e+00> : vector<16x512xf32>
    %176 = tpu.matmul %174, %175, %cst_113 {dimension_numbers = #tpu.dot_dimension_numbers<[1], [0], [0], [1], [0, 0, 1, 1], [], []>} : vector<16x72xf32>, vector<72x512xf32>, vector<16x512xf32> -> vector<16x512xf32>
    %cst_114 = arith.constant dense<0.000000e+00> : vector<16xf32>
    %177 = vector.multi_reduction <add>, %176, %cst_114 [1] : vector<16x512xf32> to vector<16xf32>
    %178 = vector.shape_cast %177 : vector<16xf32> to vector<16x1xf32>
    %cst_115 = arith.constant 0.001953125 : f32
    %179 = vector.broadcast %cst_115 : f32 to vector<16x1xf32>
    %180 = arith.mulf %178, %179 : vector<16x1xf32>
    %181 = vector.broadcast %180 : vector<16x1xf32> to vector<16x512xf32>
    %182 = arith.subf %176, %181 : vector<16x512xf32>
    %183 = arith.mulf %182, %182 : vector<16x512xf32>
    %cst_116 = arith.constant dense<0.000000e+00> : vector<16xf32>
    %184 = vector.multi_reduction <add>, %183, %cst_116 [1] : vector<16x512xf32> to vector<16xf32>
    %185 = vector.shape_cast %184 : vector<16xf32> to vector<16x1xf32>
    %cst_117 = arith.constant 0.001953125 : f32
    %186 = vector.broadcast %cst_117 : f32 to vector<16x1xf32>
    %187 = arith.mulf %185, %186 : vector<16x1xf32>
    %c0_118 = arith.constant 0 : index
    %c0_119 = arith.constant 0 : index
    %188 = vector.load %arg12[%c0_118, %c0_119] : memref<16x1xf32, #tpu.memory_space<vmem>>, vector<16x1xf32>
    %cst_120 = arith.constant 9.99999974E-6 : f32
    %189 = vector.broadcast %cst_120 : f32 to vector<16x1xf32>
    %190 = arith.addf %187, %189 : vector<16x1xf32>
    %191 = math.rsqrt %190 : vector<16x1xf32>
    %192 = arith.mulf %188, %191 : vector<16x1xf32>
    %193 = vector.broadcast %192 : vector<16x1xf32> to vector<16x512xf32>
    %194 = arith.mulf %182, %193 : vector<16x512xf32>
    %c0_121 = arith.constant 0 : index
    %c0_122 = arith.constant 0 : index
    %195 = vector.load %arg13[%c0_121, %c0_122] : memref<16x1xf32, #tpu.memory_space<vmem>>, vector<16x1xf32>
    %196 = vector.broadcast %195 : vector<16x1xf32> to vector<16x512xf32>
    %197 = arith.addf %194, %196 : vector<16x512xf32>
    %cst_123 = arith.constant 0.000000e+00 : f32
    %198 = vector.broadcast %cst_123 : f32 to vector<16x512xf32>
    %199 = arith.cmpf ogt, %197, %198 : vector<16x512xf32>
    %cst_124 = arith.constant 1.000000e-01 : f32
    %200 = vector.broadcast %cst_124 : f32 to vector<16x512xf32>
    %201 = arith.mulf %200, %197 : vector<16x512xf32>
    %202 = arith.select %199, %197, %201 : vector<16x512xi1>, vector<16x512xf32>
    %c0_125 = arith.constant 0 : index
    %c0_126 = arith.constant 0 : index
    %203 = vector.load %arg14[%c0_125, %c0_126] : memref<8x16xf32, #tpu.memory_space<vmem>>, vector<8x16xf32>
    %cst_127 = arith.constant dense<0.000000e+00> : vector<8x512xf32>
    %204 = tpu.matmul %203, %202, %cst_127 {dimension_numbers = #tpu.dot_dimension_numbers<[1], [0], [0], [1], [0, 0, 1, 1], [], []>} : vector<8x16xf32>, vector<16x512xf32>, vector<8x512xf32> -> vector<8x512xf32>
    %cst_128 = arith.constant dense<0.000000e+00> : vector<8xf32>
    %205 = vector.multi_reduction <add>, %204, %cst_128 [1] : vector<8x512xf32> to vector<8xf32>
    %206 = vector.shape_cast %205 : vector<8xf32> to vector<8x1xf32>
    %cst_129 = arith.constant 0.001953125 : f32
    %207 = vector.broadcast %cst_129 : f32 to vector<8x1xf32>
    %208 = arith.mulf %206, %207 : vector<8x1xf32>
    %209 = vector.broadcast %208 : vector<8x1xf32> to vector<8x512xf32>
    %210 = arith.subf %204, %209 : vector<8x512xf32>
    %211 = arith.mulf %210, %210 : vector<8x512xf32>
    %cst_130 = arith.constant dense<0.000000e+00> : vector<8xf32>
    %212 = vector.multi_reduction <add>, %211, %cst_130 [1] : vector<8x512xf32> to vector<8xf32>
    %213 = vector.shape_cast %212 : vector<8xf32> to vector<8x1xf32>
    %cst_131 = arith.constant 0.001953125 : f32
    %214 = vector.broadcast %cst_131 : f32 to vector<8x1xf32>
    %215 = arith.mulf %213, %214 : vector<8x1xf32>
    %c0_132 = arith.constant 0 : index
    %c0_133 = arith.constant 0 : index
    %216 = vector.load %arg15[%c0_132, %c0_133] : memref<8x1xf32, #tpu.memory_space<vmem>>, vector<8x1xf32>
    %cst_134 = arith.constant 9.99999974E-6 : f32
    %217 = vector.broadcast %cst_134 : f32 to vector<8x1xf32>
    %218 = arith.addf %215, %217 : vector<8x1xf32>
    %219 = math.rsqrt %218 : vector<8x1xf32>
    %220 = arith.mulf %216, %219 : vector<8x1xf32>
    %221 = vector.broadcast %220 : vector<8x1xf32> to vector<8x512xf32>
    %222 = arith.mulf %210, %221 : vector<8x512xf32>
    %c0_135 = arith.constant 0 : index
    %c0_136 = arith.constant 0 : index
    %223 = vector.load %arg16[%c0_135, %c0_136] : memref<8x1xf32, #tpu.memory_space<vmem>>, vector<8x1xf32>
    %224 = vector.broadcast %223 : vector<8x1xf32> to vector<8x512xf32>
    %225 = arith.addf %222, %224 : vector<8x512xf32>
    %cst_137 = arith.constant 0.000000e+00 : f32
    %226 = vector.broadcast %cst_137 : f32 to vector<8x512xf32>
    %227 = arith.cmpf ogt, %225, %226 : vector<8x512xf32>
    %cst_138 = arith.constant 1.000000e-01 : f32
    %228 = vector.broadcast %cst_138 : f32 to vector<8x512xf32>
    %229 = arith.mulf %228, %225 : vector<8x512xf32>
    %230 = arith.select %227, %225, %229 : vector<8x512xi1>, vector<8x512xf32>
    %c0_139 = arith.constant 0 : index
    %c0_140 = arith.constant 0 : index
    %231 = vector.load %arg17[%c0_139, %c0_140] : memref<8x512xf32, #tpu.memory_space<vmem>>, vector<8x512xf32>
    tpu.vector_store %arg17[%c0_139, %c0_140], %230 {strides = array<i32>} : memref<8x512xf32, #tpu.memory_space<vmem>>, vector<8x512xf32>,
    return
  }
}

</mosaic_0001>

<llo_original>
// kernel: _lambda_.1
$region0: #{_lambda_.1}
  #allocation0 [shape = 'u32[]', space=smem, size = 0x4, offset = 0x4, fixed_abs, tag = 'smem constant byte address 0x4 - core index']
  #allocation1 [shape = 'u32[72,128]{1,0:T(1,128)}', space=vmem, size = 0x9000, scoped, tag = 'internal scratch']
  #allocation2 [shape = 'f32[72,512]{1,0:T(8,128)}', space=vmem, size = 0x24000, scoped, tag = 'scratch operand']
  %s0 = inlined_call_operand.vmem [shape: f32[4,512], index: 0, kind: input, shape index: {}]
  %s1 = inlined_call_operand.vmem [shape: f32[9,512], index: 1, kind: input, shape index: {}]
  %s2 = inlined_call_operand.vmem [shape: f32[8,4], index: 2, kind: input, shape index: {}]
  %s3 = inlined_call_operand.vmem [shape: f32[8,1], index: 3, kind: input, shape index: {}]
  %s4 = inlined_call_operand.vmem [shape: f32[8,1], index: 4, kind: input, shape index: {}]
  %s5 = inlined_call_operand.vmem [shape: f32[16,72], index: 5, kind: input, shape index: {}]
  %s6 = inlined_call_operand.vmem [shape: f32[16,1], index: 6, kind: input, shape index: {}]
  %s7 = inlined_call_operand.vmem [shape: f32[16,1], index: 7, kind: input, shape index: {}]
  %s8 = inlined_call_operand.vmem [shape: f32[8,16], index: 8, kind: input, shape index: {}]
  %s9 = inlined_call_operand.vmem [shape: f32[8,1], index: 9, kind: input, shape index: {}]
  %s10 = inlined_call_operand.vmem [shape: f32[8,1], index: 10, kind: input, shape index: {}]
  %s11 = inlined_call_operand.vmem [shape: f32[16,72], index: 11, kind: input, shape index: {}]
  %s12 = inlined_call_operand.vmem [shape: f32[16,1], index: 12, kind: input, shape index: {}]
  %s13 = inlined_call_operand.vmem [shape: f32[16,1], index: 13, kind: input, shape index: {}]
  %s14 = inlined_call_operand.vmem [shape: f32[8,16], index: 14, kind: input, shape index: {}]
  %s15 = inlined_call_operand.vmem [shape: f32[8,1], index: 15, kind: input, shape index: {}]
  %s16 = inlined_call_operand.vmem [shape: f32[8,1], index: 16, kind: input, shape index: {}]
  %s17 = inlined_call_operand.vmem [shape: f32[8,512], index: 17, kind: output, shape index: {}]
  %s18 = sld [smem:[#allocation0]]
  $region78: #{_lambda_.1} parent=0
    _
  %s20 = ssub.s32 1, %s18
  %s21 = scalar_select 0, %s20, %s18
  // Predicated region
  $region2: #{_lambda_.1} parent=0 // pred_check
    _
  $region3: #{_lambda_.1} parent=0 // pred_check_branch
    %23 = sbr.rel (0) target = $region5
  $region4: #{_lambda_.1} parent=0 // pred_region
    _
  $region5: #{_lambda_.1} parent=0 // pred_fallthru
    _
  // Predicated region
  $region6: #{_lambda_.1} parent=0 // pred_check
    _
  $region7: #{_lambda_.1} parent=0 // pred_check_branch
    %25 = sbr.rel (0) target = $region9
  $region8: #{_lambda_.1} parent=0 // pred_region
    _
  $region9: #{_lambda_.1} parent=0 // pred_fallthru
    _
  // Predicated region
  $region10: #{_lambda_.1} parent=0 // pred_check
    _
  $region11: #{_lambda_.1} parent=0 // pred_check_branch
    %27 = sbr.rel (0) target = $region13
  $region12: #{_lambda_.1} parent=0 // pred_region
    _
  $region13: #{_lambda_.1} parent=0 // pred_fallthru
    _
  // Predicated region
  $region14: #{_lambda_.1} parent=0 // pred_check
    _
  $region15: #{_lambda_.1} parent=0 // pred_check_branch
    %29 = sbr.rel (0) target = $region17
  $region16: #{_lambda_.1} parent=0 // pred_region
    _
  $region17: #{_lambda_.1} parent=0 // pred_fallthru
    _
  // Predicated region
  $region18: #{_lambda_.1} parent=0 // pred_check
    _
  $region19: #{_lambda_.1} parent=0 // pred_check_branch
    %31 = sbr.rel (0) target = $region21
  $region20: #{_lambda_.1} parent=0 // pred_region
    _
  $region21: #{_lambda_.1} parent=0 // pred_fallthru
    _
  // Predicated region
  $region22: #{_lambda_.1} parent=0 // pred_check
    _
  $region23: #{_lambda_.1} parent=0 // pred_check_branch
    %33 = sbr.rel (0) target = $region25
  $region24: #{_lambda_.1} parent=0 // pred_region
    _
  $region25: #{_lambda_.1} parent=0 // pred_fallthru
    _
  // Predicated region
  $region26: #{_lambda_.1} parent=0 // pred_check
    _
  $region27: #{_lambda_.1} parent=0 // pred_check_branch
    %35 = sbr.rel (0) target = $region29
  $region28: #{_lambda_.1} parent=0 // pred_region
    _
  $region29: #{_lambda_.1} parent=0 // pred_fallthru
    _
  // Predicated region
  $region30: #{_lambda_.1} parent=0 // pred_check
    _
  $region31: #{_lambda_.1} parent=0 // pred_check_branch
    %37 = sbr.rel (0) target = $region33
  $region32: #{_lambda_.1} parent=0 // pred_region
    _
  $region33: #{_lambda_.1} parent=0 // pred_fallthru
    _
  // Predicated region
  $region34: #{_lambda_.1} parent=0 // pred_check
    _
  $region35: #{_lambda_.1} parent=0 // pred_check_branch
    %39 = sbr.rel (0) target = $region37
  $region36: #{_lambda_.1} parent=0 // pred_region
    _
  $region37: #{_lambda_.1} parent=0 // pred_fallthru
    _
  // Predicated region
  $region38: #{_lambda_.1} parent=0 // pred_check
    _
  $region39: #{_lambda_.1} parent=0 // pred_check_branch
    %41 = sbr.rel (0) target = $region41
  $region40: #{_lambda_.1} parent=0 // pred_region
    _
  $region41: #{_lambda_.1} parent=0 // pred_fallthru
    _
  // Predicated region
  $region42: #{_lambda_.1} parent=0 // pred_check
    _
  $region43: #{_lambda_.1} parent=0 // pred_check_branch
    %43 = sbr.rel (0) target = $region45
  $region44: #{_lambda_.1} parent=0 // pred_region
    _
  $region45: #{_lambda_.1} parent=0 // pred_fallthru
    _
  // Predicated region
  $region46: #{_lambda_.1} parent=0 // pred_check
    _
  $region47: #{_lambda_.1} parent=0 // pred_check_branch
    %45 = sbr.rel (0) target = $region49
  $region48: #{_lambda_.1} parent=0 // pred_region
    _
  $region49: #{_lambda_.1} parent=0 // pred_fallthru
    _
  // Predicated region
  $region50: #{_lambda_.1} parent=0 // pred_check
    _
  $region51: #{_lambda_.1} parent=0 // pred_check_branch
    %47 = sbr.rel (0) target = $region53
  $region52: #{_lambda_.1} parent=0 // pred_region
    _
  $region53: #{_lambda_.1} parent=0 // pred_fallthru
    _
  // Predicated region
  $region54: #{_lambda_.1} parent=0 // pred_check
    _
  $region55: #{_lambda_.1} parent=0 // pred_check_branch
    %49 = sbr.rel (0) target = $region57
  $region56: #{_lambda_.1} parent=0 // pred_region
    _
  $region57: #{_lambda_.1} parent=0 // pred_fallthru
    _
  // Predicated region
  $region58: #{_lambda_.1} parent=0 // pred_check
    _
  $region59: #{_lambda_.1} parent=0 // pred_check_branch
    %51 = sbr.rel (0) target = $region61
  $region60: #{_lambda_.1} parent=0 // pred_region
    _
  $region61: #{_lambda_.1} parent=0 // pred_fallthru
    _
  // Predicated region
  $region62: #{_lambda_.1} parent=0 // pred_check
    _
  $region63: #{_lambda_.1} parent=0 // pred_check_branch
    %53 = sbr.rel (0) target = $region65
  $region64: #{_lambda_.1} parent=0 // pred_region
    _
  $region65: #{_lambda_.1} parent=0 // pred_fallthru
    _
  // Predicated region
  $region66: #{_lambda_.1} parent=0 // pred_check
    _
  $region67: #{_lambda_.1} parent=0 // pred_check_branch
    %55 = sbr.rel (0) target = $region69
  $region68: #{_lambda_.1} parent=0 // pred_region
    _
  $region69: #{_lambda_.1} parent=0 // pred_fallthru
    _
  %v56 = vld [vmem:[%s0] sm:$0xff]
  %v57 = vld [vmem:[%s0 + $0x8] sm:$0xff]
  %v58 = vld [vmem:[%s2] sm:$0xff]
  %61 = vst [vmem:[#allocation1] ss:$2 sm:$0xff] %v56
  %s62 = scalar_lea.vmem [#allocation1], 16
  %63 = vst [vmem:[%s62] ss:$2 sm:$0xff] %v57
  %v64 = vld.sshfl [vmem:[#allocation1] sm:$0xff pattern:$0x75316420]
  %v65 = vld.sshfl [vmem:[#allocation1 + $0x8] sm:$0xff pattern:$0x75316420]
  %v66 = vld.sshfl [vmem:[#allocation1 + $0x10] sm:$0xff pattern:$0x75316420]
  %v67 = vld.sshfl [vmem:[#allocation1 + $0x18] sm:$0xff pattern:$0x75316420]
  %vm68 = vcmask 31744
  %v70 = vsel %vm68, %v58, 0
  %vm72 = vcmask 1043456
  %v73 = vsel %vm72, %v64, 0
  %v75 = vsel %vm72, %v65, 0
  %v77 = vsel %vm72, %v66, 0
  %v79 = vsel %vm72, %v67, 0
  %81 = vmatpush.msra.mxu0 0.0
  %82 = vmatpush.msra.mxu0 0.0
  %83 = vmatpush.msra.mxu0 0.0
  %84 = vmatpush.msra.mxu0 0.0
  %85 = vmatpush.msra.mxu0 0.0
  %86 = vmatpush.msra.mxu0 0.0
  %87 = vmatpush.msra.mxu0 0.0
  %88 = vmatpush.msra.mxu0 0.0
  %89 = vmatpush.msra.mxu0 0.0
  %90 = vmatpush.msra.mxu0 0.0
  %91 = vmatpush.msra.mxu0 0.0
  %92 = vmatpush.msra.mxu0 0.0
  %93 = vmatpush.msra.mxu0 0.0
  %94 = vmatpush.msra.mxu0 0.0
  %95 = vmatpush.msra.mxu0 0.0
  %96 = vmatpush.msra.mxu0 %v73
  %97 = vmatmul.f32.gmra.mxu0 %v70
  %v98 = vpop.f32.mrf.mxu0
  %v99 = vadd.f32 0.0, %v98
  %100 = vdwg.mxu0
  %101 = vmatpush.msra.mxu0 0.0
  %102 = vmatpush.msra.mxu0 0.0
  %103 = vmatpush.msra.mxu0 0.0
  %104 = vmatpush.msra.mxu0 0.0
  %105 = vmatpush.msra.mxu0 0.0
  %106 = vmatpush.msra.mxu0 0.0
  %107 = vmatpush.msra.mxu0 0.0
  %108 = vmatpush.msra.mxu0 0.0
  %109 = vmatpush.msra.mxu0 0.0
  %110 = vmatpush.msra.mxu0 0.0
  %111 = vmatpush.msra.mxu0 0.0
  %112 = vmatpush.msra.mxu0 0.0
  %113 = vmatpush.msra.mxu0 0.0
  %114 = vmatpush.msra.mxu0 0.0
  %115 = vmatpush.msra.mxu0 0.0
  %116 = vmatpush.msra.mxu0 %v75
  %117 = vmatmul.f32.gmra.mxu0 %v70
  %v118 = vpop.f32.mrf.mxu0
  %v119 = vadd.f32 0.0, %v118
  %120 = vdwg.mxu0
  %121 = vmatpush.msra.mxu0 0.0
  %122 = vmatpush.msra.mxu0 0.0
  %123 = vmatpush.msra.mxu0 0.0
  %124 = vmatpush.msra.mxu0 0.0
  %125 = vmatpush.msra.mxu0 0.0
  %126 = vmatpush.msra.mxu0 0.0
  %127 = vmatpush.msra.mxu0 0.0
  %128 = vmatpush.msra.mxu0 0.0
  %129 = vmatpush.msra.mxu0 0.0
  %130 = vmatpush.msra.mxu0 0.0
  %131 = vmatpush.msra.mxu0 0.0
  %132 = vmatpush.msra.mxu0 0.0
  %133 = vmatpush.msra.mxu0 0.0
  %134 = vmatpush.msra.mxu0 0.0
  %135 = vmatpush.msra.mxu0 0.0
  %136 = vmatpush.msra.mxu0 %v77
  %137 = vmatmul.f32.gmra.mxu0 %v70
  %v138 = vpop.f32.mrf.mxu0
  %v139 = vadd.f32 0.0, %v138
  %140 = vdwg.mxu0
  %141 = vmatpush.msra.mxu0 0.0
  %142 = vmatpush.msra.mxu0 0.0
  %143 = vmatpush.msra.mxu0 0.0
  %144 = vmatpush.msra.mxu0 0.0
  %145 = vmatpush.msra.mxu0 0.0
  %146 = vmatpush.msra.mxu0 0.0
  %147 = vmatpush.msra.mxu0 0.0
  %148 = vmatpush.msra.mxu0 0.0
  %149 = vmatpush.msra.mxu0 0.0
  %150 = vmatpush.msra.mxu0 0.0
  %151 = vmatpush.msra.mxu0 0.0
  %152 = vmatpush.msra.mxu0 0.0
  %153 = vmatpush.msra.mxu0 0.0
  %154 = vmatpush.msra.mxu0 0.0
  %155 = vmatpush.msra.mxu0 0.0
  %156 = vmatpush.msra.mxu0 %v79
  %157 = vmatmul.f32.gmra.mxu0 %v70
  %v158 = vpop.f32.mrf.mxu0
  %v159 = vadd.f32 0.0, %v158
  %160 = vdwg.mxu0
  %v161 = vadd.f32 %v99, %v119
  %v162 = vadd.f32 %v161, %v139
  %v163 = vadd.f32 %v162, %v159
  %164 = vadd.xlane.f32.xlu0 %v163
  %v165 = vpop.xlane.xlu0 %164
  %v166 = vmul.f32 %v165, 0.001953125
  %v167 = vsub.f32 %v99, %v166
  %v168 = vsub.f32 %v119, %v166
  %v169 = vsub.f32 %v139, %v166
  %v170 = vsub.f32 %v159, %v166
  %v171 = vmul.f32 %v167, %v167
  %v172 = vmul.f32 %v168, %v168
  %v173 = vmul.f32 %v169, %v169
  %v174 = vmul.f32 %v170, %v170
  %v175 = vadd.f32 %v171, %v172
  %v176 = vadd.f32 %v175, %v173
  %v177 = vadd.f32 %v176, %v174
  %178 = vadd.xlane.f32.xlu0 %v177
  %v179 = vpop.xlane.xlu0 %178
  %v180 = vmul.f32 %v179, 0.001953125
  %v181 = vld [vmem:[%s3] sm:$0xff]
  %v182 = vadd.f32 %v180, 1e-05
  %v183 = vrsqrt.pop %v182
  %v184 = vmul.f32 %v183, %v182
  %v185 = vmul.f32 %v184, %v183
  %v186 = vmul.f32 0.5, %v185
  %v187 = vsub.f32 1.5, %v186
  %v188 = vmul.f32 %v183, %v187
  %vm189 = vweird.f32 %v182
  %vm190 = vweird.f32 %v183
  %vm191 = vmor %vm189, %vm190
  %v192 = vsel %vm191, %v183, %v188
  %v193 = vmul.f32 %v181, %v192
  %195 = vset.pattern.permute.xlu0 0
  %196 = vperm.xlu0 %195, %v193
  %v197 = vpop.permute.xlu0 %196
  %v199 = vmul.f32 %v167, %v197
  %v200 = vmul.f32 %v168, %v197
  %v201 = vmul.f32 %v169, %v197
  %v202 = vmul.f32 %v170, %v197
  %v203 = vld [vmem:[%s4] sm:$0xff]
  %205 = vset.pattern.permute.xlu0 0
  %206 = vperm.xlu0 %205, %v203
  %v207 = vpop.permute.xlu0 %206
  %v209 = vadd.f32 %v199, %v207
  %v210 = vadd.f32 %v200, %v207
  %v211 = vadd.f32 %v201, %v207
  %v212 = vadd.f32 %v202, %v207
  %vm213 = vcmp.gt.f32.partialorder %v209, 0.0
  %vm214 = vcmp.gt.f32.partialorder %v210, 0.0
  %vm215 = vcmp.gt.f32.partialorder %v211, 0.0
  %vm216 = vcmp.gt.f32.partialorder %v212, 0.0
  %v217 = vmul.f32 %v209, 0.1
  %v218 = vmul.f32 %v210, 0.1
  %v219 = vmul.f32 %v211, 0.1
  %v220 = vmul.f32 %v212, 0.1
  %v221 = vsel %vm213, %v209, %v217
  %v222 = vsel %vm214, %v210, %v218
  %v223 = vsel %vm215, %v211, %v219
  %v224 = vsel %vm216, %v212, %v220
  %225 = vrot.lane.b32.xlu0 %v221, 17
  %v226 = vpop.permute.xlu0 %225
  %227 = vrot.lane.b32.xlu0 %v222, 17
  %v228 = vpop.permute.xlu0 %227
  %229 = vrot.lane.b32.xlu0 %v223, 17
  %v230 = vpop.permute.xlu0 %229
  %231 = vrot.lane.b32.xlu0 %v224, 17
  %v232 = vpop.permute.xlu0 %231
  %v233 = vlaneseq
  %v234 = vand.u32 %v233, 127
  %vm235 = vcmp.lt.s32.totalorder %v234, 17
  %v236 = vsel %vm235, %v230, %v232
  %v237 = vsel %vm235, %v228, %v230
  %v238 = vsel %vm235, %v226, %v228
  %v239 = vsel %vm235, %v232, %v226
  %v240 = vld [vmem:[%s1] ss:$8 sm:$0xf]
  %v242 = vperm.slane %v240, 0
  %v243 = vperm.slane %v240, 1
  %v244 = vperm.slane %v240, 2
  %v245 = vperm.slane %v240, 3
  %v250 = vmul.f32 %v239, %v242
  %v251 = vmul.f32 %v238, %v243
  %v252 = vmul.f32 %v237, %v244
  %v253 = vmul.f32 %v236, %v245
  %254 = vst [vmem:[#allocation2] sm:$0xff] %v250
  %255 = vst [vmem:[#allocation2 + $0x8] sm:$0xff] %v251
  %256 = vst [vmem:[#allocation2 + $0x10] sm:$0xff] %v252
  %257 = vst [vmem:[#allocation2 + $0x18] sm:$0xff] %v253
  %258 = vrot.lane.b32.xlu0 %v221, 16
  %v259 = vpop.permute.xlu0 %258
  %260 = vrot.lane.b32.xlu0 %v222, 16
  %v261 = vpop.permute.xlu0 %260
  %262 = vrot.lane.b32.xlu0 %v223, 16
  %v263 = vpop.permute.xlu0 %262
  %264 = vrot.lane.b32.xlu0 %v224, 16
  %v265 = vpop.permute.xlu0 %264
  %vm266 = vcmp.lt.s32.totalorder %v234, 16
  %v267 = vsel %vm266, %v263, %v265
  %v268 = vsel %vm266, %v261, %v263
  %v269 = vsel %vm266, %v259, %v261
  %v270 = vsel %vm266, %v265, %v259
  %s271 = scalar_lea.vmem %s1, 1
  %v272 = vld [vmem:[%s271] ss:$8 sm:$0xf]
  %v274 = vperm.slane %v272, 0
  %v275 = vperm.slane %v272, 1
  %v276 = vperm.slane %v272, 2
  %v277 = vperm.slane %v272, 3
  %v282 = vmul.f32 %v270, %v274
  %v283 = vmul.f32 %v269, %v275
  %v284 = vmul.f32 %v268, %v276
  %v285 = vmul.f32 %v267, %v277
  %286 = vst [vmem:[#allocation2 + $0x20] sm:$0xff] %v282
  %287 = vst [vmem:[#allocation2 + $0x28] sm:$0xff] %v283
  %288 = vst [vmem:[#allocation2 + $0x30] sm:$0xff] %v284
  %289 = vst [vmem:[#allocation2 + $0x38] sm:$0xff] %v285
  %290 = vrot.lane.b32.xlu0 %v221, 15
  %v291 = vpop.permute.xlu0 %290
  %292 = vrot.lane.b32.xlu0 %v222, 15
  %v293 = vpop.permute.xlu0 %292
  %294 = vrot.lane.b32.xlu0 %v223, 15
  %v295 = vpop.permute.xlu0 %294
  %296 = vrot.lane.b32.xlu0 %v224, 15
  %v297 = vpop.permute.xlu0 %296
  %vm298 = vcmp.lt.s32.totalorder %v234, 15
  %v299 = vsel %vm298, %v295, %v297
  %v300 = vsel %vm298, %v293, %v295
  %v301 = vsel %vm298, %v291, %v293
  %v302 = vsel %vm298, %v297, %v291
  %s303 = scalar_lea.vmem %s1, 2
  %v304 = vld [vmem:[%s303] ss:$8 sm:$0xf]
  %v306 = vperm.slane %v304, 0
  %v307 = vperm.slane %v304, 1
  %v308 = vperm.slane %v304, 2
  %v309 = vperm.slane %v304, 3
  %v314 = vmul.f32 %v302, %v306
  %v315 = vmul.f32 %v301, %v307
  %v316 = vmul.f32 %v300, %v308
  %v317 = vmul.f32 %v299, %v309
  %318 = vst [vmem:[#allocation2 + $0x40] sm:$0xff] %v314
  %319 = vst [vmem:[#allocation2 + $0x48] sm:$0xff] %v315
  %320 = vst [vmem:[#allocation2 + $0x50] sm:$0xff] %v316
  %321 = vst [vmem:[#allocation2 + $0x58] sm:$0xff] %v317
  %322 = vrot.lane.b32.xlu0 %v221, 1
  %v323 = vpop.permute.xlu0 %322
  %324 = vrot.lane.b32.xlu0 %v222, 1
  %v325 = vpop.permute.xlu0 %324
  %326 = vrot.lane.b32.xlu0 %v223, 1
  %v327 = vpop.permute.xlu0 %326
  %328 = vrot.lane.b32.xlu0 %v224, 1
  %v329 = vpop.permute.xlu0 %328
  %vm330 = vcmp.lt.s32.totalorder %v234, 1
  %v331 = vsel %vm330, %v327, %v329
  %v332 = vsel %vm330, %v325, %v327
  %v333 = vsel %vm330, %v323, %v325
  %v334 = vsel %vm330, %v329, %v323
  %s335 = scalar_lea.vmem %s1, 3
  %v336 = vld [vmem:[%s335] ss:$8 sm:$0xf]
  %v338 = vperm.slane %v336, 0
  %v339 = vperm.slane %v336, 1
  %v340 = vperm.slane %v336, 2
  %v341 = vperm.slane %v336, 3
  %v346 = vmul.f32 %v334, %v338
  %v347 = vmul.f32 %v333, %v339
  %v348 = vmul.f32 %v332, %v340
  %v349 = vmul.f32 %v331, %v341
  %350 = vst [vmem:[#allocation2 + $0x60] sm:$0xff] %v346
  %351 = vst [vmem:[#allocation2 + $0x68] sm:$0xff] %v347
  %352 = vst [vmem:[#allocation2 + $0x70] sm:$0xff] %v348
  %353 = vst [vmem:[#allocation2 + $0x78] sm:$0xff] %v349
  %s354 = scalar_lea.vmem %s1, 4
  %v355 = vld [vmem:[%s354] ss:$8 sm:$0xf]
  %v357 = vperm.slane %v355, 0
  %v358 = vperm.slane %v355, 1
  %v359 = vperm.slane %v355, 2
  %v360 = vperm.slane %v355, 3
  %v365 = vmul.f32 %v221, %v357
  %v366 = vmul.f32 %v222, %v358
  %v367 = vmul.f32 %v223, %v359
  %v368 = vmul.f32 %v224, %v360
  %369 = vst [vmem:[#allocation2 + $0x80] sm:$0xff] %v365
  %370 = vst [vmem:[#allocation2 + $0x88] sm:$0xff] %v366
  %371 = vst [vmem:[#allocation2 + $0x90] sm:$0xff] %v367
  %372 = vst [vmem:[#allocation2 + $0x98] sm:$0xff] %v368
  %373 = vrot.lane.b32.xlu0 %v221, 127
  %v374 = vpop.permute.xlu0 %373
  %375 = vrot.lane.b32.xlu0 %v222, 127
  %v376 = vpop.permute.xlu0 %375
  %377 = vrot.lane.b32.xlu0 %v223, 127
  %v378 = vpop.permute.xlu0 %377
  %379 = vrot.lane.b32.xlu0 %v224, 127
  %v380 = vpop.permute.xlu0 %379
  %vm381 = vcmp.lt.s32.totalorder %v234, 127
  %v382 = vsel %vm381, %v378, %v380
  %v383 = vsel %vm381, %v376, %v378
  %v384 = vsel %vm381, %v374, %v376
  %v385 = vsel %vm381, %v380, %v374
  %s386 = scalar_lea.vmem %s1, 5
  %v387 = vld [vmem:[%s386] ss:$8 sm:$0xf]
  %v389 = vperm.slane %v387, 0
  %v390 = vperm.slane %v387, 1
  %v391 = vperm.slane %v387, 2
  %v392 = vperm.slane %v387, 3
  %v397 = vmul.f32 %v384, %v389
  %v398 = vmul.f32 %v383, %v390
  %v399 = vmul.f32 %v382, %v391
  %v400 = vmul.f32 %v385, %v392
  %401 = vst [vmem:[#allocation2 + $0xa0] sm:$0xff] %v397
  %402 = vst [vmem:[#allocation2 + $0xa8] sm:$0xff] %v398
  %403 = vst [vmem:[#allocation2 + $0xb0] sm:$0xff] %v399
  %404 = vst [vmem:[#allocation2 + $0xb8] sm:$0xff] %v400
  %405 = vrot.lane.b32.xlu0 %v221, 113
  %v406 = vpop.permute.xlu0 %405
  %407 = vrot.lane.b32.xlu0 %v222, 113
  %v408 = vpop.permute.xlu0 %407
  %409 = vrot.lane.b32.xlu0 %v223, 113
  %v410 = vpop.permute.xlu0 %409
  %411 = vrot.lane.b32.xlu0 %v224, 113
  %v412 = vpop.permute.xlu0 %411
  %vm413 = vcmp.lt.s32.totalorder %v234, 113
  %v414 = vsel %vm413, %v410, %v412
  %v415 = vsel %vm413, %v408, %v410
  %v416 = vsel %vm413, %v406, %v408
  %v417 = vsel %vm413, %v412, %v406
  %s418 = scalar_lea.vmem %s1, 6
  %v419 = vld [vmem:[%s418] ss:$8 sm:$0xf]
  %v421 = vperm.slane %v419, 0
  %v422 = vperm.slane %v419, 1
  %v423 = vperm.slane %v419, 2
  %v424 = vperm.slane %v419, 3
  %v429 = vmul.f32 %v416, %v421
  %v430 = vmul.f32 %v415, %v422
  %v431 = vmul.f32 %v414, %v423
  %v432 = vmul.f32 %v417, %v424
  %433 = vst [vmem:[#allocation2 + $0xc0] sm:$0xff] %v429
  %434 = vst [vmem:[#allocation2 + $0xc8] sm:$0xff] %v430
  %435 = vst [vmem:[#allocation2 + $0xd0] sm:$0xff] %v431
  %436 = vst [vmem:[#allocation2 + $0xd8] sm:$0xff] %v432
  %437 = vrot.lane.b32.xlu0 %v221, 112
  %v438 = vpop.permute.xlu0 %437
  %439 = vrot.lane.b32.xlu0 %v222, 112
  %v440 = vpop.permute.xlu0 %439
  %441 = vrot.lane.b32.xlu0 %v223, 112
  %v442 = vpop.permute.xlu0 %441
  %443 = vrot.lane.b32.xlu0 %v224, 112
  %v444 = vpop.permute.xlu0 %443
  %vm445 = vcmp.lt.s32.totalorder %v234, 112
  %v446 = vsel %vm445, %v442, %v444
  %v447 = vsel %vm445, %v440, %v442
  %v448 = vsel %vm445, %v438, %v440
  %v449 = vsel %vm445, %v444, %v438
  %s450 = scalar_lea.vmem %s1, 7
  %v451 = vld [vmem:[%s450] ss:$8 sm:$0xf]
  %v453 = vperm.slane %v451, 0
  %v454 = vperm.slane %v451, 1
  %v455 = vperm.slane %v451, 2
  %v456 = vperm.slane %v451, 3
  %v461 = vmul.f32 %v448, %v453
  %v462 = vmul.f32 %v447, %v454
  %v463 = vmul.f32 %v446, %v455
  %v464 = vmul.f32 %v449, %v456
  %465 = vst [vmem:[#allocation2 + $0xe0] sm:$0xff] %v461
  %466 = vst [vmem:[#allocation2 + $0xe8] sm:$0xff] %v462
  %467 = vst [vmem:[#allocation2 + $0xf0] sm:$0xff] %v463
  %468 = vst [vmem:[#allocation2 + $0xf8] sm:$0xff] %v464
  %469 = vrot.lane.b32.xlu0 %v221, 111
  %v470 = vpop.permute.xlu0 %469
  %471 = vrot.lane.b32.xlu0 %v222, 111
  %v472 = vpop.permute.xlu0 %471
  %473 = vrot.lane.b32.xlu0 %v223, 111
  %v474 = vpop.permute.xlu0 %473
  %475 = vrot.lane.b32.xlu0 %v224, 111
  %v476 = vpop.permute.xlu0 %475
  %vm477 = vcmp.lt.s32.totalorder %v234, 111
  %v478 = vsel %vm477, %v474, %v476
  %v479 = vsel %vm477, %v472, %v474
  %v480 = vsel %vm477, %v470, %v472
  %v481 = vsel %vm477, %v476, %v470
  %s482 = scalar_lea.vmem %s1, 32
  %v483 = vld [vmem:[%s482] ss:$8 sm:$0xf]
  %v485 = vperm.slane %v483, 0
  %v486 = vperm.slane %v483, 1
  %v487 = vperm.slane %v483, 2
  %v488 = vperm.slane %v483, 3
  %v493 = vmul.f32 %v480, %v485
  %v494 = vmul.f32 %v479, %v486
  %v495 = vmul.f32 %v478, %v487
  %v496 = vmul.f32 %v481, %v488
  %497 = vst [vmem:[#allocation2 + $0x100] sm:$0xff] %v493
  %498 = vst [vmem:[#allocation2 + $0x108] sm:$0xff] %v494
  %499 = vst [vmem:[#allocation2 + $0x110] sm:$0xff] %v495
  %500 = vst [vmem:[#allocation2 + $0x118] sm:$0xff] %v496
  %v501 = vld [vmem:[%s5] sm:$0xff]
  %v502 = vld [vmem:[%s5 + $0x8] sm:$0xff]
  %v503 = vld [vmem:[#allocation2] sm:$0xff]
  %v504 = vld [vmem:[#allocation2 + $0x8] sm:$0xff]
  %v505 = vld [vmem:[#allocation2 + $0x10] sm:$0xff]
  %v506 = vld [vmem:[#allocation2 + $0x18] sm:$0xff]
  %v507 = vld [vmem:[#allocation2 + $0x20] sm:$0xff]
  %v508 = vld [vmem:[#allocation2 + $0x28] sm:$0xff]
  %v509 = vld [vmem:[#allocation2 + $0x30] sm:$0xff]
  %v510 = vld [vmem:[#allocation2 + $0x38] sm:$0xff]
  %v511 = vld [vmem:[#allocation2 + $0x40] sm:$0xff]
  %v512 = vld [vmem:[#allocation2 + $0x48] sm:$0xff]
  %v513 = vld [vmem:[#allocation2 + $0x50] sm:$0xff]
  %v514 = vld [vmem:[#allocation2 + $0x58] sm:$0xff]
  %v515 = vld [vmem:[#allocation2 + $0x60] sm:$0xff]
  %v516 = vld [vmem:[#allocation2 + $0x68] sm:$0xff]
  %v517 = vld [vmem:[#allocation2 + $0x70] sm:$0xff]
  %v518 = vld [vmem:[#allocation2 + $0x78] sm:$0xff]
  %v519 = vld [vmem:[#allocation2 + $0x80] sm:$0xff]
  %v520 = vld [vmem:[#allocation2 + $0x88] sm:$0xff]
  %v521 = vld [vmem:[#allocation2 + $0x90] sm:$0xff]
  %v522 = vld [vmem:[#allocation2 + $0x98] sm:$0xff]
  %v523 = vld [vmem:[#allocation2 + $0xa0] sm:$0xff]
  %v524 = vld [vmem:[#allocation2 + $0xa8] sm:$0xff]
  %v525 = vld [vmem:[#allocation2 + $0xb0] sm:$0xff]
  %v526 = vld [vmem:[#allocation2 + $0xb8] sm:$0xff]
  %v527 = vld [vmem:[#allocation2 + $0xc0] sm:$0xff]
  %v528 = vld [vmem:[#allocation2 + $0xc8] sm:$0xff]
  %v529 = vld [vmem:[#allocation2 + $0xd0] sm:$0xff]
  %v530 = vld [vmem:[#allocation2 + $0xd8] sm:$0xff]
  %v531 = vld [vmem:[#allocation2 + $0xe0] sm:$0xff]
  %v532 = vld [vmem:[#allocation2 + $0xe8] sm:$0xff]
  %v533 = vld [vmem:[#allocation2 + $0xf0] sm:$0xff]
  %v534 = vld [vmem:[#allocation2 + $0xf8] sm:$0xff]
  %v535 = vld [vmem:[#allocation2 + $0x100] sm:$0xff]
  %v536 = vld [vmem:[#allocation2 + $0x108] sm:$0xff]
  %v537 = vld [vmem:[#allocation2 + $0x110] sm:$0xff]
  %v538 = vld [vmem:[#allocation2 + $0x118] sm:$0xff]
  %vm539 = vcmask 588800
  %v541 = vsel %vm539, %v501, 0
  %v544 = vsel %vm539, %v502, 0
  %546 = vmatpush.msra.mxu0 0.0
  %547 = vmatpush.msra.mxu0 0.0
  %548 = vmatpush.msra.mxu0 0.0
  %549 = vmatpush.msra.mxu0 0.0
  %550 = vmatpush.msra.mxu0 0.0
  %551 = vmatpush.msra.mxu0 0.0
  %552 = vmatpush.msra.mxu0 0.0
  %553 = vmatpush.msra.mxu0 %v535
  %554 = vmatpush.msra.mxu0 %v531
  %555 = vmatpush.msra.mxu0 %v527
  %556 = vmatpush.msra.mxu0 %v523
  %557 = vmatpush.msra.mxu0 %v519
  %558 = vmatpush.msra.mxu0 %v515
  %559 = vmatpush.msra.mxu0 %v511
  %560 = vmatpush.msra.mxu0 %v507
  %561 = vmatpush.msra.mxu0 %v503
  %562 = vmatmul.f32.gmra.mxu0 %v541
  %v563 = vpop.f32.mrf.mxu0
  %v564 = vadd.f32 0.0, %v563
  %565 = vmatmul.f32.gmra.mxu0 %v544
  %v566 = vpop.f32.mrf.mxu0
  %v567 = vadd.f32 0.0, %v566
  %568 = vdwg.mxu0
  %569 = vmatpush.msra.mxu0 0.0
  %570 = vmatpush.msra.mxu0 0.0
  %571 = vmatpush.msra.mxu0 0.0
  %572 = vmatpush.msra.mxu0 0.0
  %573 = vmatpush.msra.mxu0 0.0
  %574 = vmatpush.msra.mxu0 0.0
  %575 = vmatpush.msra.mxu0 0.0
  %576 = vmatpush.msra.mxu0 %v536
  %577 = vmatpush.msra.mxu0 %v532
  %578 = vmatpush.msra.mxu0 %v528
  %579 = vmatpush.msra.mxu0 %v524
  %580 = vmatpush.msra.mxu0 %v520
  %581 = vmatpush.msra.mxu0 %v516
  %582 = vmatpush.msra.mxu0 %v512
  %583 = vmatpush.msra.mxu0 %v508
  %584 = vmatpush.msra.mxu0 %v504
  %585 = vmatmul.f32.gmra.mxu0 %v541
  %v586 = vpop.f32.mrf.mxu0
  %v587 = vadd.f32 0.0, %v586
  %588 = vmatmul.f32.gmra.mxu0 %v544
  %v589 = vpop.f32.mrf.mxu0
  %v590 = vadd.f32 0.0, %v589
  %591 = vdwg.mxu0
  %592 = vmatpush.msra.mxu0 0.0
  %593 = vmatpush.msra.mxu0 0.0
  %594 = vmatpush.msra.mxu0 0.0
  %595 = vmatpush.msra.mxu0 0.0
  %596 = vmatpush.msra.mxu0 0.0
  %597 = vmatpush.msra.mxu0 0.0
  %598 = vmatpush.msra.mxu0 0.0
  %599 = vmatpush.msra.mxu0 %v537
  %600 = vmatpush.msra.mxu0 %v533
  %601 = vmatpush.msra.mxu0 %v529
  %602 = vmatpush.msra.mxu0 %v525
  %603 = vmatpush.msra.mxu0 %v521
  %604 = vmatpush.msra.mxu0 %v517
  %605 = vmatpush.msra.mxu0 %v513
  %606 = vmatpush.msra.mxu0 %v509
  %607 = vmatpush.msra.mxu0 %v505
  %608 = vmatmul.f32.gmra.mxu0 %v541
  %v609 = vpop.f32.mrf.mxu0
  %v610 = vadd.f32 0.0, %v609
  %611 = vmatmul.f32.gmra.mxu0 %v544
  %v612 = vpop.f32.mrf.mxu0
  %v613 = vadd.f32 0.0, %v612
  %614 = vdwg.mxu0
  %615 = vmatpush.msra.mxu0 0.0
  %616 = vmatpush.msra.mxu0 0.0
  %617 = vmatpush.msra.mxu0 0.0
  %618 = vmatpush.msra.mxu0 0.0
  %619 = vmatpush.msra.mxu0 0.0
  %620 = vmatpush.msra.mxu0 0.0
  %621 = vmatpush.msra.mxu0 0.0
  %622 = vmatpush.msra.mxu0 %v538
  %623 = vmatpush.msra.mxu0 %v534
  %624 = vmatpush.msra.mxu0 %v530
  %625 = vmatpush.msra.mxu0 %v526
  %626 = vmatpush.msra.mxu0 %v522
  %627 = vmatpush.msra.mxu0 %v518
  %628 = vmatpush.msra.mxu0 %v514
  %629 = vmatpush.msra.mxu0 %v510
  %630 = vmatpush.msra.mxu0 %v506
  %631 = vmatmul.f32.gmra.mxu0 %v541
  %v632 = vpop.f32.mrf.mxu0
  %v633 = vadd.f32 0.0, %v632
  %634 = vmatmul.f32.gmra.mxu0 %v544
  %v635 = vpop.f32.mrf.mxu0
  %v636 = vadd.f32 0.0, %v635
  %637 = vdwg.mxu0
  %v638 = vadd.f32 %v564, %v587
  %v639 = vadd.f32 %v638, %v610
  %v640 = vadd.f32 %v639, %v633
  %641 = vadd.xlane.f32.xlu0 %v640
  %v642 = vpop.xlane.xlu0 %641
  %v643 = vadd.f32 %v567, %v590
  %v644 = vadd.f32 %v643, %v613
  %v645 = vadd.f32 %v644, %v636
  %646 = vadd.xlane.f32.xlu0 %v645
  %v647 = vpop.xlane.xlu0 %646
  %v648 = vmul.f32 %v642, 0.001953125
  %v649 = vmul.f32 %v647, 0.001953125
  %v650 = vsub.f32 %v564, %v648
  %v651 = vsub.f32 %v587, %v648
  %v652 = vsub.f32 %v610, %v648
  %v653 = vsub.f32 %v633, %v648
  %v654 = vsub.f32 %v567, %v649
  %v655 = vsub.f32 %v590, %v649
  %v656 = vsub.f32 %v613, %v649
  %v657 = vsub.f32 %v636, %v649
  %v658 = vmul.f32 %v650, %v650
  %v659 = vmul.f32 %v651, %v651
  %v660 = vmul.f32 %v652, %v652
  %v661 = vmul.f32 %v653, %v653
  %v662 = vmul.f32 %v654, %v654
  %v663 = vmul.f32 %v655, %v655
  %v664 = vmul.f32 %v656, %v656
  %v665 = vmul.f32 %v657, %v657
  %v666 = vadd.f32 %v658, %v659
  %v667 = vadd.f32 %v666, %v660
  %v668 = vadd.f32 %v667, %v661
  %669 = vadd.xlane.f32.xlu0 %v668
  %v670 = vpop.xlane.xlu0 %669
  %v671 = vadd.f32 %v662, %v663
  %v672 = vadd.f32 %v671, %v664
  %v673 = vadd.f32 %v672, %v665
  %674 = vadd.xlane.f32.xlu0 %v673
  %v675 = vpop.xlane.xlu0 %674
  %v676 = vmul.f32 %v670, 0.001953125
  %v677 = vmul.f32 %v675, 0.001953125
  %v678 = vld [vmem:[%s6] sm:$0xff]
  %v679 = vld [vmem:[%s6 + $0x8] sm:$0xff]
  %v680 = vadd.f32 %v676, 1e-05
  %v681 = vadd.f32 %v677, 1e-05
  %v682 = vrsqrt.pop %v680
  %v683 = vmul.f32 %v682, %v680
  %v684 = vmul.f32 %v683, %v682
  %v685 = vmul.f32 0.5, %v684
  %v686 = vsub.f32 1.5, %v685
  %v687 = vmul.f32 %v682, %v686
  %vm688 = vweird.f32 %v680
  %vm689 = vweird.f32 %v682
  %vm690 = vmor %vm688, %vm689
  %v691 = vsel %vm690, %v682, %v687
  %v692 = vrsqrt.pop %v681
  %v693 = vmul.f32 %v692, %v681
  %v694 = vmul.f32 %v693, %v692
  %v695 = vmul.f32 0.5, %v694
  %v696 = vsub.f32 1.5, %v695
  %v697 = vmul.f32 %v692, %v696
  %vm698 = vweird.f32 %v681
  %vm699 = vweird.f32 %v692
  %vm700 = vmor %vm698, %vm699
  %v701 = vsel %vm700, %v692, %v697
  %v702 = vmul.f32 %v678, %v691
  %v703 = vmul.f32 %v679, %v701
  %705 = vset.pattern.permute.xlu0 0
  %706 = vperm.xlu0 %705, %v702
  %v707 = vpop.permute.xlu0 %706
  %710 = vset.pattern.permute.xlu0 0
  %711 = vperm.xlu0 %710, %v703
  %v712 = vpop.permute.xlu0 %711
  %v714 = vmul.f32 %v650, %v707
  %v715 = vmul.f32 %v651, %v707
  %v716 = vmul.f32 %v652, %v707
  %v717 = vmul.f32 %v653, %v707
  %v718 = vmul.f32 %v654, %v712
  %v719 = vmul.f32 %v655, %v712
  %v720 = vmul.f32 %v656, %v712
  %v721 = vmul.f32 %v657, %v712
  %v722 = vld [vmem:[%s7] sm:$0xff]
  %v723 = vld [vmem:[%s7 + $0x8] sm:$0xff]
  %725 = vset.pattern.permute.xlu0 0
  %726 = vperm.xlu0 %725, %v722
  %v727 = vpop.permute.xlu0 %726
  %730 = vset.pattern.permute.xlu0 0
  %731 = vperm.xlu0 %730, %v723
  %v732 = vpop.permute.xlu0 %731
  %v734 = vadd.f32 %v714, %v727
  %v735 = vadd.f32 %v715, %v727
  %v736 = vadd.f32 %v716, %v727
  %v737 = vadd.f32 %v717, %v727
  %v738 = vadd.f32 %v718, %v732
  %v739 = vadd.f32 %v719, %v732
  %v740 = vadd.f32 %v720, %v732
  %v741 = vadd.f32 %v721, %v732
  %vm742 = vcmp.gt.f32.partialorder %v734, 0.0
  %vm743 = vcmp.gt.f32.partialorder %v735, 0.0
  %vm744 = vcmp.gt.f32.partialorder %v736, 0.0
  %vm745 = vcmp.gt.f32.partialorder %v737, 0.0
  %vm746 = vcmp.gt.f32.partialorder %v738, 0.0
  %vm747 = vcmp.gt.f32.partialorder %v739, 0.0
  %vm748 = vcmp.gt.f32.partialorder %v740, 0.0
  %vm749 = vcmp.gt.f32.partialorder %v741, 0.0
  %v750 = vmul.f32 %v734, 0.1
  %v751 = vmul.f32 %v735, 0.1
  %v752 = vmul.f32 %v736, 0.1
  %v753 = vmul.f32 %v737, 0.1
  %v754 = vmul.f32 %v738, 0.1
  %v755 = vmul.f32 %v739, 0.1
  %v756 = vmul.f32 %v740, 0.1
  %v757 = vmul.f32 %v741, 0.1
  %v758 = vsel %vm742, %v734, %v750
  %v759 = vsel %vm743, %v735, %v751
  %v760 = vsel %vm744, %v736, %v752
  %v761 = vsel %vm745, %v737, %v753
  %v762 = vsel %vm746, %v738, %v754
  %v763 = vsel %vm747, %v739, %v755
  %v764 = vsel %vm748, %v740, %v756
  %v765 = vsel %vm749, %v741, %v757
  %v766 = vld [vmem:[%s8] sm:$0xff]
  %vm767 = vcmask 130048
  %v769 = vsel %vm767, %v766, 0
  %771 = vmatpush.msra.mxu0 0.0
  %772 = vmatpush.msra.mxu0 0.0
  %773 = vmatpush.msra.mxu0 0.0
  %774 = vmatpush.msra.mxu0 0.0
  %775 = vmatpush.msra.mxu0 0.0
  %776 = vmatpush.msra.mxu0 0.0
  %777 = vmatpush.msra.mxu0 0.0
  %778 = vmatpush.msra.mxu0 0.0
  %779 = vmatpush.msra.mxu0 0.0
  %780 = vmatpush.msra.mxu0 0.0
  %781 = vmatpush.msra.mxu0 0.0
  %782 = vmatpush.msra.mxu0 0.0
  %783 = vmatpush.msra.mxu0 0.0
  %784 = vmatpush.msra.mxu0 0.0
  %785 = vmatpush.msra.mxu0 %v762
  %786 = vmatpush.msra.mxu0 %v758
  %787 = vmatmul.f32.gmra.mxu0 %v769
  %v788 = vpop.f32.mrf.mxu0
  %v789 = vadd.f32 0.0, %v788
  %790 = vdwg.mxu0
  %791 = vmatpush.msra.mxu0 0.0
  %792 = vmatpush.msra.mxu0 0.0
  %793 = vmatpush.msra.mxu0 0.0
  %794 = vmatpush.msra.mxu0 0.0
  %795 = vmatpush.msra.mxu0 0.0
  %796 = vmatpush.msra.mxu0 0.0
  %797 = vmatpush.msra.mxu0 0.0
  %798 = vmatpush.msra.mxu0 0.0
  %799 = vmatpush.msra.mxu0 0.0
  %800 = vmatpush.msra.mxu0 0.0
  %801 = vmatpush.msra.mxu0 0.0
  %802 = vmatpush.msra.mxu0 0.0
  %803 = vmatpush.msra.mxu0 0.0
  %804 = vmatpush.msra.mxu0 0.0
  %805 = vmatpush.msra.mxu0 %v763
  %806 = vmatpush.msra.mxu0 %v759
  %807 = vmatmul.f32.gmra.mxu0 %v769
  %v808 = vpop.f32.mrf.mxu0
  %v809 = vadd.f32 0.0, %v808
  %810 = vdwg.mxu0
  %811 = vmatpush.msra.mxu0 0.0
  %812 = vmatpush.msra.mxu0 0.0
  %813 = vmatpush.msra.mxu0 0.0
  %814 = vmatpush.msra.mxu0 0.0
  %815 = vmatpush.msra.mxu0 0.0
  %816 = vmatpush.msra.mxu0 0.0
  %817 = vmatpush.msra.mxu0 0.0
  %818 = vmatpush.msra.mxu0 0.0
  %819 = vmatpush.msra.mxu0 0.0
  %820 = vmatpush.msra.mxu0 0.0
  %821 = vmatpush.msra.mxu0 0.0
  %822 = vmatpush.msra.mxu0 0.0
  %823 = vmatpush.msra.mxu0 0.0
  %824 = vmatpush.msra.mxu0 0.0
  %825 = vmatpush.msra.mxu0 %v764
  %826 = vmatpush.msra.mxu0 %v760
  %827 = vmatmul.f32.gmra.mxu0 %v769
  %v828 = vpop.f32.mrf.mxu0
  %v829 = vadd.f32 0.0, %v828
  %830 = vdwg.mxu0
  %831 = vmatpush.msra.mxu0 0.0
  %832 = vmatpush.msra.mxu0 0.0
  %833 = vmatpush.msra.mxu0 0.0
  %834 = vmatpush.msra.mxu0 0.0
  %835 = vmatpush.msra.mxu0 0.0
  %836 = vmatpush.msra.mxu0 0.0
  %837 = vmatpush.msra.mxu0 0.0
  %838 = vmatpush.msra.mxu0 0.0
  %839 = vmatpush.msra.mxu0 0.0
  %840 = vmatpush.msra.mxu0 0.0
  %841 = vmatpush.msra.mxu0 0.0
  %842 = vmatpush.msra.mxu0 0.0
  %843 = vmatpush.msra.mxu0 0.0
  %844 = vmatpush.msra.mxu0 0.0
  %845 = vmatpush.msra.mxu0 %v765
  %846 = vmatpush.msra.mxu0 %v761
  %847 = vmatmul.f32.gmra.mxu0 %v769
  %v848 = vpop.f32.mrf.mxu0
  %v849 = vadd.f32 0.0, %v848
  %850 = vdwg.mxu0
  %v851 = vadd.f32 %v789, %v809
  %v852 = vadd.f32 %v851, %v829
  %v853 = vadd.f32 %v852, %v849
  %854 = vadd.xlane.f32.xlu0 %v853
  %v855 = vpop.xlane.xlu0 %854
  %v856 = vmul.f32 %v855, 0.001953125
  %v857 = vsub.f32 %v789, %v856
  %v858 = vsub.f32 %v809, %v856
  %v859 = vsub.f32 %v829, %v856
  %v860 = vsub.f32 %v849, %v856
  %v861 = vmul.f32 %v857, %v857
  %v862 = vmul.f32 %v858, %v858
  %v863 = vmul.f32 %v859, %v859
  %v864 = vmul.f32 %v860, %v860
  %v865 = vadd.f32 %v861, %v862
  %v866 = vadd.f32 %v865, %v863
  %v867 = vadd.f32 %v866, %v864
  %868 = vadd.xlane.f32.xlu0 %v867
  %v869 = vpop.xlane.xlu0 %868
  %v870 = vmul.f32 %v869, 0.001953125
  %v871 = vld [vmem:[%s9] sm:$0xff]
  %v872 = vadd.f32 %v870, 1e-05
  %v873 = vrsqrt.pop %v872
  %v874 = vmul.f32 %v873, %v872
  %v875 = vmul.f32 %v874, %v873
  %v876 = vmul.f32 0.5, %v875
  %v877 = vsub.f32 1.5, %v876
  %v878 = vmul.f32 %v873, %v877
  %vm879 = vweird.f32 %v872
  %vm880 = vweird.f32 %v873
  %vm881 = vmor %vm879, %vm880
  %v882 = vsel %vm881, %v873, %v878
  %v883 = vmul.f32 %v871, %v882
  %885 = vset.pattern.permute.xlu0 0
  %886 = vperm.xlu0 %885, %v883
  %v887 = vpop.permute.xlu0 %886
  %v889 = vmul.f32 %v857, %v887
  %v890 = vmul.f32 %v858, %v887
  %v891 = vmul.f32 %v859, %v887
  %v892 = vmul.f32 %v860, %v887
  %v893 = vld [vmem:[%s10] sm:$0xff]
  %895 = vset.pattern.permute.xlu0 0
  %896 = vperm.xlu0 %895, %v893
  %v897 = vpop.permute.xlu0 %896
  %v899 = vadd.f32 %v889, %v897
  %v900 = vadd.f32 %v890, %v897
  %v901 = vadd.f32 %v891, %v897
  %v902 = vadd.f32 %v892, %v897
  %vm903 = vcmp.gt.f32.partialorder %v899, 0.0
  %vm904 = vcmp.gt.f32.partialorder %v900, 0.0
  %vm905 = vcmp.gt.f32.partialorder %v901, 0.0
  %vm906 = vcmp.gt.f32.partialorder %v902, 0.0
  %v907 = vmul.f32 %v899, 0.1
  %v908 = vmul.f32 %v900, 0.1
  %v909 = vmul.f32 %v901, 0.1
  %v910 = vmul.f32 %v902, 0.1
  %v911 = vsel %vm903, %v899, %v907
  %v912 = vsel %vm904, %v900, %v908
  %v913 = vsel %vm905, %v901, %v909
  %v914 = vsel %vm906, %v902, %v910
  %915 = vrot.lane.b32.xlu0 %v911, 17
  %v916 = vpop.permute.xlu0 %915
  %917 = vrot.lane.b32.xlu0 %v912, 17
  %v918 = vpop.permute.xlu0 %917
  %919 = vrot.lane.b32.xlu0 %v913, 17
  %v920 = vpop.permute.xlu0 %919
  %921 = vrot.lane.b32.xlu0 %v914, 17
  %v922 = vpop.permute.xlu0 %921
  %v923 = vsel %vm235, %v920, %v922
  %v924 = vsel %vm235, %v918, %v920
  %v925 = vsel %vm235, %v916, %v918
  %v926 = vsel %vm235, %v922, %v916
  %v927 = vld [vmem:[%s1] ss:$8 sm:$0xf]
  %v929 = vperm.slane %v927, 0
  %v930 = vperm.slane %v927, 1
  %v931 = vperm.slane %v927, 2
  %v932 = vperm.slane %v927, 3
  %v937 = vmul.f32 %v926, %v929
  %v938 = vmul.f32 %v925, %v930
  %v939 = vmul.f32 %v924, %v931
  %v940 = vmul.f32 %v923, %v932
  %941 = vst [vmem:[#allocation2] sm:$0xff] %v937
  %942 = vst [vmem:[#allocation2 + $0x8] sm:$0xff] %v938
  %943 = vst [vmem:[#allocation2 + $0x10] sm:$0xff] %v939
  %944 = vst [vmem:[#allocation2 + $0x18] sm:$0xff] %v940
  %945 = vrot.lane.b32.xlu0 %v911, 16
  %v946 = vpop.permute.xlu0 %945
  %947 = vrot.lane.b32.xlu0 %v912, 16
  %v948 = vpop.permute.xlu0 %947
  %949 = vrot.lane.b32.xlu0 %v913, 16
  %v950 = vpop.permute.xlu0 %949
  %951 = vrot.lane.b32.xlu0 %v914, 16
  %v952 = vpop.permute.xlu0 %951
  %v953 = vsel %vm266, %v950, %v952
  %v954 = vsel %vm266, %v948, %v950
  %v955 = vsel %vm266, %v946, %v948
  %v956 = vsel %vm266, %v952, %v946
  %v957 = vld [vmem:[%s271] ss:$8 sm:$0xf]
  %v959 = vperm.slane %v957, 0
  %v960 = vperm.slane %v957, 1
  %v961 = vperm.slane %v957, 2
  %v962 = vperm.slane %v957, 3
  %v967 = vmul.f32 %v956, %v959
  %v968 = vmul.f32 %v955, %v960
  %v969 = vmul.f32 %v954, %v961
  %v970 = vmul.f32 %v953, %v962
  %971 = vst [vmem:[#allocation2 + $0x20] sm:$0xff] %v967
  %972 = vst [vmem:[#allocation2 + $0x28] sm:$0xff] %v968
  %973 = vst [vmem:[#allocation2 + $0x30] sm:$0xff] %v969
  %974 = vst [vmem:[#allocation2 + $0x38] sm:$0xff] %v970
  %975 = vrot.lane.b32.xlu0 %v911, 15
  %v976 = vpop.permute.xlu0 %975
  %977 = vrot.lane.b32.xlu0 %v912, 15
  %v978 = vpop.permute.xlu0 %977
  %979 = vrot.lane.b32.xlu0 %v913, 15
  %v980 = vpop.permute.xlu0 %979
  %981 = vrot.lane.b32.xlu0 %v914, 15
  %v982 = vpop.permute.xlu0 %981
  %v983 = vsel %vm298, %v980, %v982
  %v984 = vsel %vm298, %v978, %v980
  %v985 = vsel %vm298, %v976, %v978
  %v986 = vsel %vm298, %v982, %v976
  %v987 = vld [vmem:[%s303] ss:$8 sm:$0xf]
  %v989 = vperm.slane %v987, 0
  %v990 = vperm.slane %v987, 1
  %v991 = vperm.slane %v987, 2
  %v992 = vperm.slane %v987, 3
  %v997 = vmul.f32 %v986, %v989
  %v998 = vmul.f32 %v985, %v990
  %v999 = vmul.f32 %v984, %v991
  %v1000 = vmul.f32 %v983, %v992
  %1001 = vst [vmem:[#allocation2 + $0x40] sm:$0xff] %v997
  %1002 = vst [vmem:[#allocation2 + $0x48] sm:$0xff] %v998
  %1003 = vst [vmem:[#allocation2 + $0x50] sm:$0xff] %v999
  %1004 = vst [vmem:[#allocation2 + $0x58] sm:$0xff] %v1000
  %1005 = vrot.lane.b32.xlu0 %v911, 1
  %v1006 = vpop.permute.xlu0 %1005
  %1007 = vrot.lane.b32.xlu0 %v912, 1
  %v1008 = vpop.permute.xlu0 %1007
  %1009 = vrot.lane.b32.xlu0 %v913, 1
  %v1010 = vpop.permute.xlu0 %1009
  %1011 = vrot.lane.b32.xlu0 %v914, 1
  %v1012 = vpop.permute.xlu0 %1011
  %v1013 = vsel %vm330, %v1010, %v1012
  %v1014 = vsel %vm330, %v1008, %v1010
  %v1015 = vsel %vm330, %v1006, %v1008
  %v1016 = vsel %vm330, %v1012, %v1006
  %v1017 = vld [vmem:[%s335] ss:$8 sm:$0xf]
  %v1019 = vperm.slane %v1017, 0
  %v1020 = vperm.slane %v1017, 1
  %v1021 = vperm.slane %v1017, 2
  %v1022 = vperm.slane %v1017, 3
  %v1027 = vmul.f32 %v1016, %v1019
  %v1028 = vmul.f32 %v1015, %v1020
  %v1029 = vmul.f32 %v1014, %v1021
  %v1030 = vmul.f32 %v1013, %v1022
  %1031 = vst [vmem:[#allocation2 + $0x60] sm:$0xff] %v1027
  %1032 = vst [vmem:[#allocation2 + $0x68] sm:$0xff] %v1028
  %1033 = vst [vmem:[#allocation2 + $0x70] sm:$0xff] %v1029
  %1034 = vst [vmem:[#allocation2 + $0x78] sm:$0xff] %v1030
  %v1035 = vld [vmem:[%s354] ss:$8 sm:$0xf]
  %v1037 = vperm.slane %v1035, 0
  %v1038 = vperm.slane %v1035, 1
  %v1039 = vperm.slane %v1035, 2
  %v1040 = vperm.slane %v1035, 3
  %v1045 = vmul.f32 %v911, %v1037
  %v1046 = vmul.f32 %v912, %v1038
  %v1047 = vmul.f32 %v913, %v1039
  %v1048 = vmul.f32 %v914, %v1040
  %1049 = vst [vmem:[#allocation2 + $0x80] sm:$0xff] %v1045
  %1050 = vst [vmem:[#allocation2 + $0x88] sm:$0xff] %v1046
  %1051 = vst [vmem:[#allocation2 + $0x90] sm:$0xff] %v1047
  %1052 = vst [vmem:[#allocation2 + $0x98] sm:$0xff] %v1048
  %1053 = vrot.lane.b32.xlu0 %v911, 127
  %v1054 = vpop.permute.xlu0 %1053
  %1055 = vrot.lane.b32.xlu0 %v912, 127
  %v1056 = vpop.permute.xlu0 %1055
  %1057 = vrot.lane.b32.xlu0 %v913, 127
  %v1058 = vpop.permute.xlu0 %1057
  %1059 = vrot.lane.b32.xlu0 %v914, 127
  %v1060 = vpop.permute.xlu0 %1059
  %v1061 = vsel %vm381, %v1058, %v1060
  %v1062 = vsel %vm381, %v1056, %v1058
  %v1063 = vsel %vm381, %v1054, %v1056
  %v1064 = vsel %vm381, %v1060, %v1054
  %v1065 = vld [vmem:[%s386] ss:$8 sm:$0xf]
  %v1067 = vperm.slane %v1065, 0
  %v1068 = vperm.slane %v1065, 1
  %v1069 = vperm.slane %v1065, 2
  %v1070 = vperm.slane %v1065, 3
  %v1075 = vmul.f32 %v1063, %v1067
  %v1076 = vmul.f32 %v1062, %v1068
  %v1077 = vmul.f32 %v1061, %v1069
  %v1078 = vmul.f32 %v1064, %v1070
  %1079 = vst [vmem:[#allocation2 + $0xa0] sm:$0xff] %v1075
  %1080 = vst [vmem:[#allocation2 + $0xa8] sm:$0xff] %v1076
  %1081 = vst [vmem:[#allocation2 + $0xb0] sm:$0xff] %v1077
  %1082 = vst [vmem:[#allocation2 + $0xb8] sm:$0xff] %v1078
  %1083 = vrot.lane.b32.xlu0 %v911, 113
  %v1084 = vpop.permute.xlu0 %1083
  %1085 = vrot.lane.b32.xlu0 %v912, 113
  %v1086 = vpop.permute.xlu0 %1085
  %1087 = vrot.lane.b32.xlu0 %v913, 113
  %v1088 = vpop.permute.xlu0 %1087
  %1089 = vrot.lane.b32.xlu0 %v914, 113
  %v1090 = vpop.permute.xlu0 %1089
  %v1091 = vsel %vm413, %v1088, %v1090
  %v1092 = vsel %vm413, %v1086, %v1088
  %v1093 = vsel %vm413, %v1084, %v1086
  %v1094 = vsel %vm413, %v1090, %v1084
  %v1095 = vld [vmem:[%s418] ss:$8 sm:$0xf]
  %v1097 = vperm.slane %v1095, 0
  %v1098 = vperm.slane %v1095, 1
  %v1099 = vperm.slane %v1095, 2
  %v1100 = vperm.slane %v1095, 3
  %v1105 = vmul.f32 %v1093, %v1097
  %v1106 = vmul.f32 %v1092, %v1098
  %v1107 = vmul.f32 %v1091, %v1099
  %v1108 = vmul.f32 %v1094, %v1100
  %1109 = vst [vmem:[#allocation2 + $0xc0] sm:$0xff] %v1105
  %1110 = vst [vmem:[#allocation2 + $0xc8] sm:$0xff] %v1106
  %1111 = vst [vmem:[#allocation2 + $0xd0] sm:$0xff] %v1107
  %1112 = vst [vmem:[#allocation2 + $0xd8] sm:$0xff] %v1108
  %1113 = vrot.lane.b32.xlu0 %v911, 112
  %v1114 = vpop.permute.xlu0 %1113
  %1115 = vrot.lane.b32.xlu0 %v912, 112
  %v1116 = vpop.permute.xlu0 %1115
  %1117 = vrot.lane.b32.xlu0 %v913, 112
  %v1118 = vpop.permute.xlu0 %1117
  %1119 = vrot.lane.b32.xlu0 %v914, 112
  %v1120 = vpop.permute.xlu0 %1119
  %v1121 = vsel %vm445, %v1118, %v1120
  %v1122 = vsel %vm445, %v1116, %v1118
  %v1123 = vsel %vm445, %v1114, %v1116
  %v1124 = vsel %vm445, %v1120, %v1114
  %v1125 = vld [vmem:[%s450] ss:$8 sm:$0xf]
  %v1127 = vperm.slane %v1125, 0
  %v1128 = vperm.slane %v1125, 1
  %v1129 = vperm.slane %v1125, 2
  %v1130 = vperm.slane %v1125, 3
  %v1135 = vmul.f32 %v1123, %v1127
  %v1136 = vmul.f32 %v1122, %v1128
  %v1137 = vmul.f32 %v1121, %v1129
  %v1138 = vmul.f32 %v1124, %v1130
  %1139 = vst [vmem:[#allocation2 + $0xe0] sm:$0xff] %v1135
  %1140 = vst [vmem:[#allocation2 + $0xe8] sm:$0xff] %v1136
  %1141 = vst [vmem:[#allocation2 + $0xf0] sm:$0xff] %v1137
  %1142 = vst [vmem:[#allocation2 + $0xf8] sm:$0xff] %v1138
  %1143 = vrot.lane.b32.xlu0 %v911, 111
  %v1144 = vpop.permute.xlu0 %1143
  %1145 = vrot.lane.b32.xlu0 %v912, 111
  %v1146 = vpop.permute.xlu0 %1145
  %1147 = vrot.lane.b32.xlu0 %v913, 111
  %v1148 = vpop.permute.xlu0 %1147
  %1149 = vrot.lane.b32.xlu0 %v914, 111
  %v1150 = vpop.permute.xlu0 %1149
  %v1151 = vsel %vm477, %v1148, %v1150
  %v1152 = vsel %vm477, %v1146, %v1148
  %v1153 = vsel %vm477, %v1144, %v1146
  %v1154 = vsel %vm477, %v1150, %v1144
  %v1155 = vld [vmem:[%s482] ss:$8 sm:$0xf]
  %v1157 = vperm.slane %v1155, 0
  %v1158 = vperm.slane %v1155, 1
  %v1159 = vperm.slane %v1155, 2
  %v1160 = vperm.slane %v1155, 3
  %v1165 = vmul.f32 %v1153, %v1157
  %v1166 = vmul.f32 %v1152, %v1158
  %v1167 = vmul.f32 %v1151, %v1159
  %v1168 = vmul.f32 %v1154, %v1160
  %1169 = vst [vmem:[#allocation2 + $0x100] sm:$0xff] %v1165
  %1170 = vst [vmem:[#allocation2 + $0x108] sm:$0xff] %v1166
  %1171 = vst [vmem:[#allocation2 + $0x110] sm:$0xff] %v1167
  %1172 = vst [vmem:[#allocation2 + $0x118] sm:$0xff] %v1168
  %v1173 = vld [vmem:[%s11] sm:$0xff]
  %v1174 = vld [vmem:[%s11 + $0x8] sm:$0xff]
  %v1175 = vld [vmem:[#allocation2] sm:$0xff]
  %v1176 = vld [vmem:[#allocation2 + $0x8] sm:$0xff]
  %v1177 = vld [vmem:[#allocation2 + $0x10] sm:$0xff]
  %v1178 = vld [vmem:[#allocation2 + $0x18] sm:$0xff]
  %v1179 = vld [vmem:[#allocation2 + $0x20] sm:$0xff]
  %v1180 = vld [vmem:[#allocation2 + $0x28] sm:$0xff]
  %v1181 = vld [vmem:[#allocation2 + $0x30] sm:$0xff]
  %v1182 = vld [vmem:[#allocation2 + $0x38] sm:$0xff]
  %v1183 = vld [vmem:[#allocation2 + $0x40] sm:$0xff]
  %v1184 = vld [vmem:[#allocation2 + $0x48] sm:$0xff]
  %v1185 = vld [vmem:[#allocation2 + $0x50] sm:$0xff]
  %v1186 = vld [vmem:[#allocation2 + $0x58] sm:$0xff]
  %v1187 = vld [vmem:[#allocation2 + $0x60] sm:$0xff]
  %v1188 = vld [vmem:[#allocation2 + $0x68] sm:$0xff]
  %v1189 = vld [vmem:[#allocation2 + $0x70] sm:$0xff]
  %v1190 = vld [vmem:[#allocation2 + $0x78] sm:$0xff]
  %v1191 = vld [vmem:[#allocation2 + $0x80] sm:$0xff]
  %v1192 = vld [vmem:[#allocation2 + $0x88] sm:$0xff]
  %v1193 = vld [vmem:[#allocation2 + $0x90] sm:$0xff]
  %v1194 = vld [vmem:[#allocation2 + $0x98] sm:$0xff]
  %v1195 = vld [vmem:[#allocation2 + $0xa0] sm:$0xff]
  %v1196 = vld [vmem:[#allocation2 + $0xa8] sm:$0xff]
  %v1197 = vld [vmem:[#allocation2 + $0xb0] sm:$0xff]
  %v1198 = vld [vmem:[#allocation2 + $0xb8] sm:$0xff]
  %v1199 = vld [vmem:[#allocation2 + $0xc0] sm:$0xff]
  %v1200 = vld [vmem:[#allocation2 + $0xc8] sm:$0xff]
  %v1201 = vld [vmem:[#allocation2 + $0xd0] sm:$0xff]
  %v1202 = vld [vmem:[#allocation2 + $0xd8] sm:$0xff]
  %v1203 = vld [vmem:[#allocation2 + $0xe0] sm:$0xff]
  %v1204 = vld [vmem:[#allocation2 + $0xe8] sm:$0xff]
  %v1205 = vld [vmem:[#allocation2 + $0xf0] sm:$0xff]
  %v1206 = vld [vmem:[#allocation2 + $0xf8] sm:$0xff]
  %v1207 = vld [vmem:[#allocation2 + $0x100] sm:$0xff]
  %v1208 = vld [vmem:[#allocation2 + $0x108] sm:$0xff]
  %v1209 = vld [vmem:[#allocation2 + $0x110] sm:$0xff]
  %v1210 = vld [vmem:[#allocation2 + $0x118] sm:$0xff]
  %v1212 = vsel %vm539, %v1173, 0
  %v1215 = vsel %vm539, %v1174, 0
  %1217 = vmatpush.msra.mxu0 0.0
  %1218 = vmatpush.msra.mxu0 0.0
  %1219 = vmatpush.msra.mxu0 0.0
  %1220 = vmatpush.msra.mxu0 0.0
  %1221 = vmatpush.msra.mxu0 0.0
  %1222 = vmatpush.msra.mxu0 0.0
  %1223 = vmatpush.msra.mxu0 0.0
  %1224 = vmatpush.msra.mxu0 %v1207
  %1225 = vmatpush.msra.mxu0 %v1203
  %1226 = vmatpush.msra.mxu0 %v1199
  %1227 = vmatpush.msra.mxu0 %v1195
  %1228 = vmatpush.msra.mxu0 %v1191
  %1229 = vmatpush.msra.mxu0 %v1187
  %1230 = vmatpush.msra.mxu0 %v1183
  %1231 = vmatpush.msra.mxu0 %v1179
  %1232 = vmatpush.msra.mxu0 %v1175
  %1233 = vmatmul.f32.gmra.mxu0 %v1212
  %v1234 = vpop.f32.mrf.mxu0
  %v1235 = vadd.f32 0.0, %v1234
  %1236 = vmatmul.f32.gmra.mxu0 %v1215
  %v1237 = vpop.f32.mrf.mxu0
  %v1238 = vadd.f32 0.0, %v1237
  %1239 = vdwg.mxu0
  %1240 = vmatpush.msra.mxu0 0.0
  %1241 = vmatpush.msra.mxu0 0.0
  %1242 = vmatpush.msra.mxu0 0.0
  %1243 = vmatpush.msra.mxu0 0.0
  %1244 = vmatpush.msra.mxu0 0.0
  %1245 = vmatpush.msra.mxu0 0.0
  %1246 = vmatpush.msra.mxu0 0.0
  %1247 = vmatpush.msra.mxu0 %v1208
  %1248 = vmatpush.msra.mxu0 %v1204
  %1249 = vmatpush.msra.mxu0 %v1200
  %1250 = vmatpush.msra.mxu0 %v1196
  %1251 = vmatpush.msra.mxu0 %v1192
  %1252 = vmatpush.msra.mxu0 %v1188
  %1253 = vmatpush.msra.mxu0 %v1184
  %1254 = vmatpush.msra.mxu0 %v1180
  %1255 = vmatpush.msra.mxu0 %v1176
  %1256 = vmatmul.f32.gmra.mxu0 %v1212
  %v1257 = vpop.f32.mrf.mxu0
  %v1258 = vadd.f32 0.0, %v1257
  %1259 = vmatmul.f32.gmra.mxu0 %v1215
  %v1260 = vpop.f32.mrf.mxu0
  %v1261 = vadd.f32 0.0, %v1260
  %1262 = vdwg.mxu0
  %1263 = vmatpush.msra.mxu0 0.0
  %1264 = vmatpush.msra.mxu0 0.0
  %1265 = vmatpush.msra.mxu0 0.0
  %1266 = vmatpush.msra.mxu0 0.0
  %1267 = vmatpush.msra.mxu0 0.0
  %1268 = vmatpush.msra.mxu0 0.0
  %1269 = vmatpush.msra.mxu0 0.0
  %1270 = vmatpush.msra.mxu0 %v1209
  %1271 = vmatpush.msra.mxu0 %v1205
  %1272 = vmatpush.msra.mxu0 %v1201
  %1273 = vmatpush.msra.mxu0 %v1197
  %1274 = vmatpush.msra.mxu0 %v1193
  %1275 = vmatpush.msra.mxu0 %v1189
  %1276 = vmatpush.msra.mxu0 %v1185
  %1277 = vmatpush.msra.mxu0 %v1181
  %1278 = vmatpush.msra.mxu0 %v1177
  %1279 = vmatmul.f32.gmra.mxu0 %v1212
  %v1280 = vpop.f32.mrf.mxu0
  %v1281 = vadd.f32 0.0, %v1280
  %1282 = vmatmul.f32.gmra.mxu0 %v1215
  %v1283 = vpop.f32.mrf.mxu0
  %v1284 = vadd.f32 0.0, %v1283
  %1285 = vdwg.mxu0
  %1286 = vmatpush.msra.mxu0 0.0
  %1287 = vmatpush.msra.mxu0 0.0
  %1288 = vmatpush.msra.mxu0 0.0
  %1289 = vmatpush.msra.mxu0 0.0
  %1290 = vmatpush.msra.mxu0 0.0
  %1291 = vmatpush.msra.mxu0 0.0
  %1292 = vmatpush.msra.mxu0 0.0
  %1293 = vmatpush.msra.mxu0 %v1210
  %1294 = vmatpush.msra.mxu0 %v1206
  %1295 = vmatpush.msra.mxu0 %v1202
  %1296 = vmatpush.msra.mxu0 %v1198
  %1297 = vmatpush.msra.mxu0 %v1194
  %1298 = vmatpush.msra.mxu0 %v1190
  %1299 = vmatpush.msra.mxu0 %v1186
  %1300 = vmatpush.msra.mxu0 %v1182
  %1301 = vmatpush.msra.mxu0 %v1178
  %1302 = vmatmul.f32.gmra.mxu0 %v1212
  %v1303 = vpop.f32.mrf.mxu0
  %v1304 = vadd.f32 0.0, %v1303
  %1305 = vmatmul.f32.gmra.mxu0 %v1215
  %v1306 = vpop.f32.mrf.mxu0
  %v1307 = vadd.f32 0.0, %v1306
  %1308 = vdwg.mxu0
  %v1309 = vadd.f32 %v1235, %v1258
  %v1310 = vadd.f32 %v1309, %v1281
  %v1311 = vadd.f32 %v1310, %v1304
  %1312 = vadd.xlane.f32.xlu0 %v1311
  %v1313 = vpop.xlane.xlu0 %1312
  %v1314 = vadd.f32 %v1238, %v1261
  %v1315 = vadd.f32 %v1314, %v1284
  %v1316 = vadd.f32 %v1315, %v1307
  %1317 = vadd.xlane.f32.xlu0 %v1316
  %v1318 = vpop.xlane.xlu0 %1317
  %v1319 = vmul.f32 %v1313, 0.001953125
  %v1320 = vmul.f32 %v1318, 0.001953125
  %v1321 = vsub.f32 %v1235, %v1319
  %v1322 = vsub.f32 %v1258, %v1319
  %v1323 = vsub.f32 %v1281, %v1319
  %v1324 = vsub.f32 %v1304, %v1319
  %v1325 = vsub.f32 %v1238, %v1320
  %v1326 = vsub.f32 %v1261, %v1320
  %v1327 = vsub.f32 %v1284, %v1320
  %v1328 = vsub.f32 %v1307, %v1320
  %v1329 = vmul.f32 %v1321, %v1321
  %v1330 = vmul.f32 %v1322, %v1322
  %v1331 = vmul.f32 %v1323, %v1323
  %v1332 = vmul.f32 %v1324, %v1324
  %v1333 = vmul.f32 %v1325, %v1325
  %v1334 = vmul.f32 %v1326, %v1326
  %v1335 = vmul.f32 %v1327, %v1327
  %v1336 = vmul.f32 %v1328, %v1328
  %v1337 = vadd.f32 %v1329, %v1330
  %v1338 = vadd.f32 %v1337, %v1331
  %v1339 = vadd.f32 %v1338, %v1332
  %1340 = vadd.xlane.f32.xlu0 %v1339
  %v1341 = vpop.xlane.xlu0 %1340
  %v1342 = vadd.f32 %v1333, %v1334
  %v1343 = vadd.f32 %v1342, %v1335
  %v1344 = vadd.f32 %v1343, %v1336
  %1345 = vadd.xlane.f32.xlu0 %v1344
  %v1346 = vpop.xlane.xlu0 %1345
  %v1347 = vmul.f32 %v1341, 0.001953125
  %v1348 = vmul.f32 %v1346, 0.001953125
  %v1349 = vld [vmem:[%s12] sm:$0xff]
  %v1350 = vld [vmem:[%s12 + $0x8] sm:$0xff]
  %v1351 = vadd.f32 %v1347, 1e-05
  %v1352 = vadd.f32 %v1348, 1e-05
  %v1353 = vrsqrt.pop %v1351
  %v1354 = vmul.f32 %v1353, %v1351
  %v1355 = vmul.f32 %v1354, %v1353
  %v1356 = vmul.f32 0.5, %v1355
  %v1357 = vsub.f32 1.5, %v1356
  %v1358 = vmul.f32 %v1353, %v1357
  %vm1359 = vweird.f32 %v1351
  %vm1360 = vweird.f32 %v1353
  %vm1361 = vmor %vm1359, %vm1360
  %v1362 = vsel %vm1361, %v1353, %v1358
  %v1363 = vrsqrt.pop %v1352
  %v1364 = vmul.f32 %v1363, %v1352
  %v1365 = vmul.f32 %v1364, %v1363
  %v1366 = vmul.f32 0.5, %v1365
  %v1367 = vsub.f32 1.5, %v1366
  %v1368 = vmul.f32 %v1363, %v1367
  %vm1369 = vweird.f32 %v1352
  %vm1370 = vweird.f32 %v1363
  %vm1371 = vmor %vm1369, %vm1370
  %v1372 = vsel %vm1371, %v1363, %v1368
  %v1373 = vmul.f32 %v1349, %v1362
  %v1374 = vmul.f32 %v1350, %v1372
  %1376 = vset.pattern.permute.xlu0 0
  %1377 = vperm.xlu0 %1376, %v1373
  %v1378 = vpop.permute.xlu0 %1377
  %1381 = vset.pattern.permute.xlu0 0
  %1382 = vperm.xlu0 %1381, %v1374
  %v1383 = vpop.permute.xlu0 %1382
  %v1385 = vmul.f32 %v1321, %v1378
  %v1386 = vmul.f32 %v1322, %v1378
  %v1387 = vmul.f32 %v1323, %v1378
  %v1388 = vmul.f32 %v1324, %v1378
  %v1389 = vmul.f32 %v1325, %v1383
  %v1390 = vmul.f32 %v1326, %v1383
  %v1391 = vmul.f32 %v1327, %v1383
  %v1392 = vmul.f32 %v1328, %v1383
  %v1393 = vld [vmem:[%s13] sm:$0xff]
  %v1394 = vld [vmem:[%s13 + $0x8] sm:$0xff]
  %1396 = vset.pattern.permute.xlu0 0
  %1397 = vperm.xlu0 %1396, %v1393
  %v1398 = vpop.permute.xlu0 %1397
  %1401 = vset.pattern.permute.xlu0 0
  %1402 = vperm.xlu0 %1401, %v1394
  %v1403 = vpop.permute.xlu0 %1402
  %v1405 = vadd.f32 %v1385, %v1398
  %v1406 = vadd.f32 %v1386, %v1398
  %v1407 = vadd.f32 %v1387, %v1398
  %v1408 = vadd.f32 %v1388, %v1398
  %v1409 = vadd.f32 %v1389, %v1403
  %v1410 = vadd.f32 %v1390, %v1403
  %v1411 = vadd.f32 %v1391, %v1403
  %v1412 = vadd.f32 %v1392, %v1403
  %vm1413 = vcmp.gt.f32.partialorder %v1405, 0.0
  %vm1414 = vcmp.gt.f32.partialorder %v1406, 0.0
  %vm1415 = vcmp.gt.f32.partialorder %v1407, 0.0
  %vm1416 = vcmp.gt.f32.partialorder %v1408, 0.0
  %vm1417 = vcmp.gt.f32.partialorder %v1409, 0.0
  %vm1418 = vcmp.gt.f32.partialorder %v1410, 0.0
  %vm1419 = vcmp.gt.f32.partialorder %v1411, 0.0
  %vm1420 = vcmp.gt.f32.partialorder %v1412, 0.0
  %v1421 = vmul.f32 %v1405, 0.1
  %v1422 = vmul.f32 %v1406, 0.1
  %v1423 = vmul.f32 %v1407, 0.1
  %v1424 = vmul.f32 %v1408, 0.1
  %v1425 = vmul.f32 %v1409, 0.1
  %v1426 = vmul.f32 %v1410, 0.1
  %v1427 = vmul.f32 %v1411, 0.1
  %v1428 = vmul.f32 %v1412, 0.1
  %v1429 = vsel %vm1413, %v1405, %v1421
  %v1430 = vsel %vm1414, %v1406, %v1422
  %v1431 = vsel %vm1415, %v1407, %v1423
  %v1432 = vsel %vm1416, %v1408, %v1424
  %v1433 = vsel %vm1417, %v1409, %v1425
  %v1434 = vsel %vm1418, %v1410, %v1426
  %v1435 = vsel %vm1419, %v1411, %v1427
  %v1436 = vsel %vm1420, %v1412, %v1428
  %v1437 = vld [vmem:[%s14] sm:$0xff]
  %v1439 = vsel %vm767, %v1437, 0
  %1441 = vmatpush.msra.mxu0 0.0
  %1442 = vmatpush.msra.mxu0 0.0
  %1443 = vmatpush.msra.mxu0 0.0
  %1444 = vmatpush.msra.mxu0 0.0
  %1445 = vmatpush.msra.mxu0 0.0
  %1446 = vmatpush.msra.mxu0 0.0
  %1447 = vmatpush.msra.mxu0 0.0
  %1448 = vmatpush.msra.mxu0 0.0
  %1449 = vmatpush.msra.mxu0 0.0
  %1450 = vmatpush.msra.mxu0 0.0
  %1451 = vmatpush.msra.mxu0 0.0
  %1452 = vmatpush.msra.mxu0 0.0
  %1453 = vmatpush.msra.mxu0 0.0
  %1454 = vmatpush.msra.mxu0 0.0
  %1455 = vmatpush.msra.mxu0 %v1433
  %1456 = vmatpush.msra.mxu0 %v1429
  %1457 = vmatmul.f32.gmra.mxu0 %v1439
  %v1458 = vpop.f32.mrf.mxu0
  %v1459 = vadd.f32 0.0, %v1458
  %1460 = vdwg.mxu0
  %1461 = vmatpush.msra.mxu0 0.0
  %1462 = vmatpush.msra.mxu0 0.0
  %1463 = vmatpush.msra.mxu0 0.0
  %1464 = vmatpush.msra.mxu0 0.0
  %1465 = vmatpush.msra.mxu0 0.0
  %1466 = vmatpush.msra.mxu0 0.0
  %1467 = vmatpush.msra.mxu0 0.0
  %1468 = vmatpush.msra.mxu0 0.0
  %1469 = vmatpush.msra.mxu0 0.0
  %1470 = vmatpush.msra.mxu0 0.0
  %1471 = vmatpush.msra.mxu0 0.0
  %1472 = vmatpush.msra.mxu0 0.0
  %1473 = vmatpush.msra.mxu0 0.0
  %1474 = vmatpush.msra.mxu0 0.0
  %1475 = vmatpush.msra.mxu0 %v1434
  %1476 = vmatpush.msra.mxu0 %v1430
  %1477 = vmatmul.f32.gmra.mxu0 %v1439
  %v1478 = vpop.f32.mrf.mxu0
  %v1479 = vadd.f32 0.0, %v1478
  %1480 = vdwg.mxu0
  %1481 = vmatpush.msra.mxu0 0.0
  %1482 = vmatpush.msra.mxu0 0.0
  %1483 = vmatpush.msra.mxu0 0.0
  %1484 = vmatpush.msra.mxu0 0.0
  %1485 = vmatpush.msra.mxu0 0.0
  %1486 = vmatpush.msra.mxu0 0.0
  %1487 = vmatpush.msra.mxu0 0.0
  %1488 = vmatpush.msra.mxu0 0.0
  %1489 = vmatpush.msra.mxu0 0.0
  %1490 = vmatpush.msra.mxu0 0.0
  %1491 = vmatpush.msra.mxu0 0.0
  %1492 = vmatpush.msra.mxu0 0.0
  %1493 = vmatpush.msra.mxu0 0.0
  %1494 = vmatpush.msra.mxu0 0.0
  %1495 = vmatpush.msra.mxu0 %v1435
  %1496 = vmatpush.msra.mxu0 %v1431
  %1497 = vmatmul.f32.gmra.mxu0 %v1439
  %v1498 = vpop.f32.mrf.mxu0
  %v1499 = vadd.f32 0.0, %v1498
  %1500 = vdwg.mxu0
  %1501 = vmatpush.msra.mxu0 0.0
  %1502 = vmatpush.msra.mxu0 0.0
  %1503 = vmatpush.msra.mxu0 0.0
  %1504 = vmatpush.msra.mxu0 0.0
  %1505 = vmatpush.msra.mxu0 0.0
  %1506 = vmatpush.msra.mxu0 0.0
  %1507 = vmatpush.msra.mxu0 0.0
  %1508 = vmatpush.msra.mxu0 0.0
  %1509 = vmatpush.msra.mxu0 0.0
  %1510 = vmatpush.msra.mxu0 0.0
  %1511 = vmatpush.msra.mxu0 0.0
  %1512 = vmatpush.msra.mxu0 0.0
  %1513 = vmatpush.msra.mxu0 0.0
  %1514 = vmatpush.msra.mxu0 0.0
  %1515 = vmatpush.msra.mxu0 %v1436
  %1516 = vmatpush.msra.mxu0 %v1432
  %1517 = vmatmul.f32.gmra.mxu0 %v1439
  %v1518 = vpop.f32.mrf.mxu0
  %v1519 = vadd.f32 0.0, %v1518
  %1520 = vdwg.mxu0
  %v1521 = vadd.f32 %v1459, %v1479
  %v1522 = vadd.f32 %v1521, %v1499
  %v1523 = vadd.f32 %v1522, %v1519
  %1524 = vadd.xlane.f32.xlu0 %v1523
  %v1525 = vpop.xlane.xlu0 %1524
  %v1526 = vmul.f32 %v1525, 0.001953125
  %v1527 = vsub.f32 %v1459, %v1526
  %v1528 = vsub.f32 %v1479, %v1526
  %v1529 = vsub.f32 %v1499, %v1526
  %v1530 = vsub.f32 %v1519, %v1526
  %v1531 = vmul.f32 %v1527, %v1527
  %v1532 = vmul.f32 %v1528, %v1528
  %v1533 = vmul.f32 %v1529, %v1529
  %v1534 = vmul.f32 %v1530, %v1530
  %v1535 = vadd.f32 %v1531, %v1532
  %v1536 = vadd.f32 %v1535, %v1533
  %v1537 = vadd.f32 %v1536, %v1534
  %1538 = vadd.xlane.f32.xlu0 %v1537
  %v1539 = vpop.xlane.xlu0 %1538
  %v1540 = vmul.f32 %v1539, 0.001953125
  %v1541 = vld [vmem:[%s15] sm:$0xff]
  %v1542 = vadd.f32 %v1540, 1e-05
  %v1543 = vrsqrt.pop %v1542
  %v1544 = vmul.f32 %v1543, %v1542
  %v1545 = vmul.f32 %v1544, %v1543
  %v1546 = vmul.f32 0.5, %v1545
  %v1547 = vsub.f32 1.5, %v1546
  %v1548 = vmul.f32 %v1543, %v1547
  %vm1549 = vweird.f32 %v1542
  %vm1550 = vweird.f32 %v1543
  %vm1551 = vmor %vm1549, %vm1550
  %v1552 = vsel %vm1551, %v1543, %v1548
  %v1553 = vmul.f32 %v1541, %v1552
  %1555 = vset.pattern.permute.xlu0 0
  %1556 = vperm.xlu0 %1555, %v1553
  %v1557 = vpop.permute.xlu0 %1556
  %v1559 = vmul.f32 %v1527, %v1557
  %v1560 = vmul.f32 %v1528, %v1557
  %v1561 = vmul.f32 %v1529, %v1557
  %v1562 = vmul.f32 %v1530, %v1557
  %v1563 = vld [vmem:[%s16] sm:$0xff]
  %1565 = vset.pattern.permute.xlu0 0
  %1566 = vperm.xlu0 %1565, %v1563
  %v1567 = vpop.permute.xlu0 %1566
  %v1569 = vadd.f32 %v1559, %v1567
  %v1570 = vadd.f32 %v1560, %v1567
  %v1571 = vadd.f32 %v1561, %v1567
  %v1572 = vadd.f32 %v1562, %v1567
  %vm1573 = vcmp.gt.f32.partialorder %v1569, 0.0
  %vm1574 = vcmp.gt.f32.partialorder %v1570, 0.0
  %vm1575 = vcmp.gt.f32.partialorder %v1571, 0.0
  %vm1576 = vcmp.gt.f32.partialorder %v1572, 0.0
  %v1577 = vmul.f32 %v1569, 0.1
  %v1578 = vmul.f32 %v1570, 0.1
  %v1579 = vmul.f32 %v1571, 0.1
  %v1580 = vmul.f32 %v1572, 0.1
  %v1581 = vsel %vm1573, %v1569, %v1577
  %v1582 = vsel %vm1574, %v1570, %v1578
  %v1583 = vsel %vm1575, %v1571, %v1579
  %v1584 = vsel %vm1576, %v1572, %v1580
  %1585 = vst [vmem:[%s17] sm:$0xff] %v1581
  %1586 = vst [vmem:[%s17 + $0x8] sm:$0xff] %v1582
  %1587 = vst [vmem:[%s17 + $0x10] sm:$0xff] %v1583
  %1588 = vst [vmem:[%s17 + $0x18] sm:$0xff] %v1584
  // Predicated region
  $region70: #{_lambda_.1} parent=0 // pred_check
    _
  $region71: #{_lambda_.1} parent=0 // pred_check_branch
    %1590 = sbr.rel (0) target = $region73
  $region72: #{_lambda_.1} parent=0 // pred_region
    _
  $region73: #{_lambda_.1} parent=0 // pred_fallthru
    _
  // Predicated region
  $region74: #{_lambda_.1} parent=0 // pred_check
    _
  $region75: #{_lambda_.1} parent=0 // pred_check_branch
    %1592 = sbr.rel (0) target = $region77
  $region76: #{_lambda_.1} parent=0 // pred_region
    _
  $region77: #{_lambda_.1} parent=0 // pred_fallthru
    _

</llo_original>
